<compile_context>
chip_gen: v6e
topology: v6e:2x2x1
jax: 0.10.0
libtpu: 0.0.40
codegen_flags: <defaults>
</compile_context>

<pallas_src>
import functools

import jax
import jax.numpy as jnp
from jax.experimental import pallas as pl
from jax.experimental.pallas import tpu as pltpu

_EPS = 1e-5          # nn.BatchNorm1d default eps
_NEG_SLOPE = 0.01    # nn.LeakyReLU default negative_slope
_LANE = 128
_RBF_COUNT = 9
_RBF_MAX = 6.0

_VMEM = pl.BlockSpec(memory_space=pltpu.MemorySpace.VMEM)


def _round_up(v, m):
    return ((v + m - 1) // m) * m


def _silu(v):
    return v * jax.nn.sigmoid(v)


def _leaky(v):
    return jnp.where(v >= 0.0, v, _NEG_SLOPE * v)


# ------------------------------ fused kernel -------------------------------

def _gign_kernel(
    x_ref,          # (N, node_dim)        f32
    rbf_ref,        # (E, 2*(RBF+1))       f32   branch-selected RBF (+ bias-indicator cols)
    row_ref,        # (E, 1)               int32 message source node per edge
    colt_ref,       # (1, E)               int32 message target node per edge
    batch_ref,      # (1, N)               int32 graph id per node
    lin_w_ref,      # (node_dim, 128)      f32   lin_node weight, lane-duplicated [W|W|0]
    coord_w_ref,    # (L, 2*(RBF+1), 128)  f32   packed coord_cov|coord_ncov (+ biases)
    node_w_ref,     # (L, 128, 128)        f32   block-diag node_cov|node_ncov (BN folded)
    fcw_ref,        # (F+1, 128, 128)      f32   FC blocks (BN folded) + output head
    bias_ref,       # (1+L+F+1, 1, 128)    f32   packed biases
    o_ref,          # (G_pad, 128)         f32
    *, n_layers, n_fc, hidden,
):
    f32 = jnp.float32
    bf16 = jnp.bfloat16
    n_nodes = x_ref.shape[0]
    n_edges = rbf_ref.shape[0]
    h = hidden
    lanes = o_ref.shape[1]

    # --- gather / scatter one-hots built in bf16 (0/1 is exact in bf16) ----------
    lane_e = jax.lax.broadcasted_iota(jnp.int32, (n_edges, n_nodes), 1)
    g_src = jnp.where(lane_e == row_ref[...], 1.0, 0.0).astype(bf16)        # (E, N)
    sub_n = jax.lax.broadcasted_iota(jnp.int32, (n_nodes, n_edges), 0)
    s_dst = jnp.where(sub_n == colt_ref[...], 1.0, 0.0).astype(bf16)        # (N, E)

    lane_n = jax.lax.broadcasted_iota(jnp.int32, (n_nodes, lanes), 1)
    first_half = jnp.where(lane_n < h, 1.0, 0.0)                            # (N, 128)

    # --- lin_node: Linear + SiLU; weight already duplicated into lanes [0,H)|[H,2H)
    hd = _silu(jnp.dot(x_ref[...], lin_w_ref[...], preferred_element_type=f32)
               + bias_ref[0])                                               # (N, 128)
    h_cur = hd * first_half                                                 # [h | 0]

    # --- HIL layers, cov/ncov branches lane-packed --------------------------------
    for l in range(n_layers):
        # Radial features: branch selection and the coord-Linear biases are baked into
        # rbf_ref / coord_w_ref, so inactive lanes come out exactly SiLU(0) == 0.
        radial = _silu(jnp.dot(rbf_ref[...], coord_w_ref[l],
                               preferred_element_type=f32))                 # (E, 128)
        # gather x_j = h[row]  (bf16 MXU, f32 accumulate)
        x_j = jnp.dot(g_src, hd.astype(bf16), preferred_element_type=f32)   # (E, 128)
        msg = x_j * radial                                                  # (E, 128)
        # scatter-add to target nodes
        agg = jnp.dot(s_dst, msg.astype(bf16), preferred_element_type=f32)  # (N, 128)
        # x + aggregate, then block-diagonal node MLP (Linear + LeakyReLU, BN folded)
        packed = _leaky(jnp.dot(hd + agg, node_w_ref[l],
                                preferred_element_type=f32)
                        + bias_ref[1 + l])                                  # (N, 128)
        # Fold cov+ncov halves, then re-duplicate for the next layer.  The symmetric
        # roll pair is correct for either rotation convention; node weights / radial /
        # biases are zero in lanes >= 2H so any spill-over into those lanes is inert.
        folded = (packed
                  + pltpu.roll(packed, h, 1)
                  + pltpu.roll(packed, lanes - h, 1))
        h_cur = folded * first_half                                         # [h | 0]
        hd = (h_cur
              + pltpu.roll(h_cur, h, 1)
              + pltpu.roll(h_cur, lanes - h, 1))                            # [h | h | *]

    # --- global_add_pool -----------------------------------------------------------
    g_pad = o_ref.shape[0]
    pool_iota = jax.lax.broadcasted_iota(jnp.int32, (g_pad, n_nodes), 0)
    pool = jnp.where(pool_iota == batch_ref[...], 1.0, 0.0).astype(bf16)    # (G, N)
    z = jnp.dot(pool, h_cur.astype(bf16), preferred_element_type=f32)       # (G, 128)

    # --- FC head: F x (Linear -> Dropout(eval) -> LeakyReLU -> BN(eval, folded)),
    #     final Linear(H, 1) stored as the last fcw slice ---------------------------
    for j in range(n_fc):
        z = _leaky(jnp.dot(z, fcw_ref[j], preferred_element_type=f32)
                   + bias_ref[1 + n_layers + j])
    o_ref[...] = (jnp.dot(z, fcw_ref[n_fc], preferred_element_type=f32)
                  + bias_ref[1 + n_layers + n_fc])                          # (G_pad, 128)


# ----------------------------- host-side packing ----------------------------

def _rbf(d, d_min=0.0, d_max=_RBF_MAX, d_count=_RBF_COUNT):
    # Matches the PyTorch reference: mu = linspace(min,max,count), sigma=(max-min)/count,
    # rbf = exp(-((d - mu)/sigma)^2)
    mu = jnp.linspace(d_min, d_max, d_count)
    sigma = (d_max - d_min) / d_count
    z = (d[:, None] - mu[None, :]) / sigma
    return jnp.exp(-(z * z))


def _prepare_inputs(params, x, ei_intra, ei_inter, pos, batch):
    n_nodes, node_dim = x.shape
    hidden = params["lin_node_w"].shape[1]
    if 2 * hidden > _LANE:
        raise ValueError("lane-packed kernel requires 2*hidden <= 128")
    e1 = int(ei_intra.shape[1])
    e2 = int(ei_inter.shape[1])
    if e1 == 0 or e2 == 0:
        raise ValueError("both edge sets must be non-empty")

    h = hidden
    n_layers = 3
    pos = jnp.asarray(pos, jnp.float32)

    def edge_feats(ei):
        row = ei[0].astype(jnp.int32)
        col = ei[1].astype(jnp.int32)
        diff = pos[row] - pos[col]
        d = jnp.sqrt(jnp.sum(diff * diff, axis=-1))
        return row, col, _rbf(d)

    row_c, col_c, rbf_c = edge_feats(ei_intra)
    row_n, col_n, rbf_n = edge_feats(ei_inter)

    # Branch-selected RBF slab: cols [0:9] = intra rbf (else 0), col 9 = intra bias
    # indicator, cols [10:19] = inter rbf (else 0), col 19 = inter bias indicator.
    k_pack = 2 * (_RBF_COUNT + 1)
    rbf2 = jnp.zeros((e1 + e2, k_pack), jnp.float32)
    rbf2 = rbf2.at[:e1, 0:_RBF_COUNT].set(rbf_c)
    rbf2 = rbf2.at[:e1, _RBF_COUNT].set(1.0)
    rbf2 = rbf2.at[e1:, _RBF_COUNT + 1:2 * _RBF_COUNT + 1].set(rbf_n)
    rbf2 = rbf2.at[e1:, k_pack - 1].set(1.0)

    row_all = jnp.concatenate([row_c, row_n]).reshape(-1, 1)
    colt_all = jnp.concatenate([col_c, col_n]).reshape(1, -1)
    batch_row = batch.astype(jnp.int32).reshape(1, -1)

    # eval-mode BatchNorm1d with fresh running stats -> pure positive scale, zero shift;
    # LeakyReLU(a*x) == a*LeakyReLU(x) for a > 0, so fold the scale into the Linear.
    bn_scale = 1.0 / (1.0 + _EPS) ** 0.5

    def lane_pair(a, b):
        rows = a.shape[0]
        out = jnp.zeros((rows, _LANE), jnp.float32)
        out = out.at[:, :h].set(a)
        out = out.at[:, h:2 * h].set(b)
        return out

    lin_w = lane_pair(params["lin_node_w"], params["lin_node_w"])
    lin_b = lane_pair(params["lin_node_b"].reshape(1, -1),
                      params["lin_node_b"].reshape(1, -1))

    gs = [params[f"gconv{i}"] for i in range(1, n_layers + 1)]

    def coord_pack(g):
        w = jnp.zeros((k_pack, _LANE), jnp.float32)
        w = w.at[0:_RBF_COUNT, :h].set(g["coord_cov_w"])
        w = w.at[_RBF_COUNT, :h].set(g["coord_cov_b"])
        w = w.at[_RBF_COUNT + 1:2 * _RBF_COUNT + 1, h:2 * h].set(g["coord_ncov_w"])
        w = w.at[k_pack - 1, h:2 * h].set(g["coord_ncov_b"])
        return w

    def node_pack(g):
        w = jnp.zeros((_LANE, _LANE), jnp.float32)
        w = w.at[:h, :h].set(g["node_cov_w"] * bn_scale)
        w = w.at[h:2 * h, h:2 * h].set(g["node_ncov_w"] * bn_scale)
        b = lane_pair(g["node_cov_b"].reshape(1, -1) * bn_scale,
                      g["node_ncov_b"].reshape(1, -1) * bn_scale)
        return w, b

    coord_w = jnp.stack([coord_pack(g) for g in gs])
    node_wb = [node_pack(g) for g in gs]
    node_w = jnp.stack([w for w, _ in node_wb])
    node_b = [b for _, b in node_wb]

    def fc_pack(blk):
        w = jnp.zeros((_LANE, _LANE), jnp.float32).at[:h, :h].set(blk["w"] * bn_scale)
        b = jnp.zeros((1, _LANE), jnp.float32).at[:, :h].set(
            blk["b"].reshape(1, -1) * bn_scale)
        return w, b

    fc_wb = [fc_pack(blk) for blk in params["fc_blocks"]]
    out_w = jnp.zeros((_LANE, _LANE), jnp.float32).at[:h, :1].set(params["fc_out_w"])
    out_b = jnp.zeros((1, _LANE), jnp.float32).at[0, 0].set(params["fc_out_b"][0])
    fcw = jnp.stack([w for w, _ in fc_wb] + [out_w])

    biases = jnp.stack([lin_b] + node_b + [b for _, b in fc_wb] + [out_b])  # (nb,1,128)

    return (x.astype(jnp.float32), rbf2, row_all, colt_all, batch_row,
            lin_w, coord_w, node_w, fcw, biases)


def _vmem_limit_bytes(n_nodes, n_edges, g_pad, n_layers, n_fc):
    f32, bf16 = 4, 2
    onehots = (2 * n_edges * n_nodes + g_pad * n_nodes) * bf16
    edge_tmp = 4 * n_edges * _LANE * f32
    node_tmp = 8 * n_nodes * _LANE * f32
    weights = (n_layers * (2 * (_RBF_COUNT + 1) + _LANE) * _LANE
               + (n_fc + 1) * _LANE * _LANE) * f32
    est = 3 * (onehots + edge_tmp + node_tmp) + 2 * weights + (4 << 20)
    return int(min(max(est, 32 << 20), 100 << 20))


def gign_forward(params, x, ei_intra, ei_inter, pos, batch, num_graphs):
    n_nodes = x.shape[0]
    e_tot = int(ei_intra.shape[1]) + int(ei_inter.shape[1])
    g_pad = _round_up(max(num_graphs, 1), 8)
    n_layers = 3
    n_fc = len(params["fc_blocks"])
    hidden = params["lin_node_w"].shape[1]

    args = _prepare_inputs(params, x, ei_intra, ei_inter, pos, batch)
    kern = functools.partial(_gign_kernel, n_layers=n_layers, n_fc=n_fc, hidden=hidden)
    out = pl.pallas_call(
        kern,
        out_shape=jax.ShapeDtypeStruct((g_pad, _LANE), jnp.float32),
        in_specs=[_VMEM] * len(args),
        out_specs=_VMEM,
        compiler_params=pltpu.CompilerParams(
            vmem_limit_bytes=_vmem_limit_bytes(n_nodes, e_tot, g_pad, n_layers, n_fc)),
    )(*args)
    return out[:num_graphs, 0]


# ------------------------------ parameter init ------------------------------

def _lin_init(key, fan_in, fan_out):
    k1, k2 = jax.random.split(key)
    bound = 1.0 / float(fan_in) ** 0.5
    w = jax.random.uniform(k1, (fan_in, fan_out), jnp.float32, -bound, bound)
    b = jax.random.uniform(k2, (fan_out,), jnp.float32, -bound, bound)
    return w, b


def init_params(key, node_dim, hidden_dim, rbf_count=_RBF_COUNT):
    keys = iter(jax.random.split(key, 32))
    p = {}
    p["lin_node_w"], p["lin_node_b"] = _lin_init(next(keys), node_dim, hidden_dim)
    for i in range(1, 4):
        g = {}
        g["coord_cov_w"], g["coord_cov_b"] = _lin_init(next(keys), rbf_count, hidden_dim)
        g["coord_ncov_w"], g["coord_ncov_b"] = _lin_init(next(keys), rbf_count, hidden_dim)
        g["node_cov_w"], g["node_cov_b"] = _lin_init(next(keys), hidden_dim, hidden_dim)
        g["node_ncov_w"], g["node_ncov_b"] = _lin_init(next(keys), hidden_dim, hidden_dim)
        p[f"gconv{i}"] = g
    p["fc_blocks"] = []
    for _ in range(3):
        w, b = _lin_init(next(keys), hidden_dim, hidden_dim)
        p["fc_blocks"].append({"w": w, "b": b})
    p["fc_out_w"], p["fc_out_b"] = _lin_init(next(keys), hidden_dim, 1)
    return p


# ----------------------------------- main -----------------------------------

if __name__ == "__main__":
    key = jax.random.PRNGKey(0)
    node_dim, hidden_dim = 8, 32
    n_nodes, num_graphs = 16, 2
    e_intra, e_inter = 24, 12

    ks = jax.random.split(key, 6)
    x = jax.random.normal(ks[0], (n_nodes, node_dim), jnp.float32)
    pos = jax.random.normal(ks[1], (n_nodes, 3), jnp.float32) * 3.0
    edge_index_intra = jax.random.randint(ks[2], (2, e_intra), 0, n_nodes, jnp.int32)
    edge_index_inter = jax.random.randint(ks[3], (2, e_inter), 0, n_nodes, jnp.int32)
    batch = jnp.concatenate([
        jnp.zeros(n_nodes // 2, jnp.int32),
        jnp.ones(n_nodes - n_nodes // 2, jnp.int32),
    ])

    params = init_params(ks[4], node_dim, hidden_dim)

    out = gign_forward(params, x, edge_index_intra, edge_index_inter,
                       pos, batch, num_graphs)
    out = jax.block_until_ready(out)
    assert out.shape == (num_graphs,)
    assert bool(jnp.all(jnp.isfinite(out)))
    print("KERNEL_OK")
</pallas_src>

<mosaic_0001>
module attributes {stable_mosaic.version = 11 : i64} {
  func.func @_gign_kernel(%arg0: memref<16x8xf32, #tpu.memory_space<vmem>>, %arg1: memref<36x20xf32, #tpu.memory_space<vmem>>, %arg2: memref<36x1xi32, #tpu.memory_space<vmem>>, %arg3: memref<1x36xi32, #tpu.memory_space<vmem>>, %arg4: memref<1x16xi32, #tpu.memory_space<vmem>>, %arg5: memref<8x128xf32, #tpu.memory_space<vmem>>, %arg6: memref<3x20x128xf32, #tpu.memory_space<vmem>>, %arg7: memref<3x128x128xf32, #tpu.memory_space<vmem>>, %arg8: memref<4x128x128xf32, #tpu.memory_space<vmem>>, %arg9: memref<8x1x128xf32, #tpu.memory_space<vmem>>, %arg10: memref<8x128xf32, #tpu.memory_space<vmem>>) attributes {dimension_semantics = [], scalar_prefetch = 0 : i64, scratch_operands = 0 : i64, tpu.core_type = #tpu.core_type<tc>} {
    %0 = tpu.iota {dimensions = array<i32: 1>} : vector<36x16xi32>
    %c0 = arith.constant 0 : index
    %c0_0 = arith.constant 0 : index
    %1 = vector.load %arg2[%c0, %c0_0] : memref<36x1xi32, #tpu.memory_space<vmem>>, vector<36x1xi32>
    %2 = vector.broadcast %1 : vector<36x1xi32> to vector<36x16xi32>
    %3 = arith.cmpi eq, %0, %2 : vector<36x16xi32>
    %cst = arith.constant 1.000000e+00 : f32
    %cst_1 = arith.constant 0.000000e+00 : f32
    %4 = vector.broadcast %cst : f32 to vector<36x16xf32>
    %5 = vector.broadcast %cst_1 : f32 to vector<36x16xf32>
    %6 = arith.select %3, %4, %5 : vector<36x16xi1>, vector<36x16xf32>
    %7 = arith.truncf %6 : vector<36x16xf32> to vector<36x16xbf16>
    %8 = tpu.iota {dimensions = array<i32: 0>} : vector<16x36xi32>
    %c0_2 = arith.constant 0 : index
    %c0_3 = arith.constant 0 : index
    %9 = vector.load %arg3[%c0_2, %c0_3] : memref<1x36xi32, #tpu.memory_space<vmem>>, vector<1x36xi32>
    %10 = vector.broadcast %9 : vector<1x36xi32> to vector<16x36xi32>
    %11 = arith.cmpi eq, %8, %10 : vector<16x36xi32>
    %cst_4 = arith.constant 1.000000e+00 : f32
    %cst_5 = arith.constant 0.000000e+00 : f32
    %12 = vector.broadcast %cst_4 : f32 to vector<16x36xf32>
    %13 = vector.broadcast %cst_5 : f32 to vector<16x36xf32>
    %14 = arith.select %11, %12, %13 : vector<16x36xi1>, vector<16x36xf32>
    %15 = arith.truncf %14 : vector<16x36xf32> to vector<16x36xbf16>
    %16 = tpu.iota {dimensions = array<i32: 1>} : vector<16x128xi32>
    %c32_i32 = arith.constant 32 : i32
    %17 = vector.broadcast %c32_i32 : i32 to vector<16x128xi32>
    %18 = arith.cmpi slt, %16, %17 : vector<16x128xi32>
    %cst_6 = arith.constant 1.000000e+00 : f32
    %cst_7 = arith.constant 0.000000e+00 : f32
    %19 = vector.broadcast %cst_6 : f32 to vector<16x128xf32>
    %20 = vector.broadcast %cst_7 : f32 to vector<16x128xf32>
    %21 = arith.select %18, %19, %20 : vector<16x128xi1>, vector<16x128xf32>
    %c0_8 = arith.constant 0 : index
    %c0_9 = arith.constant 0 : index
    %22 = vector.load %arg0[%c0_8, %c0_9] : memref<16x8xf32, #tpu.memory_space<vmem>>, vector<16x8xf32>
    %c0_10 = arith.constant 0 : index
    %c0_11 = arith.constant 0 : index
    %23 = vector.load %arg5[%c0_10, %c0_11] : memref<8x128xf32, #tpu.memory_space<vmem>>, vector<8x128xf32>
    %cst_12 = arith.constant dense<0.000000e+00> : vector<16x128xf32>
    %24 = tpu.matmul %22, %23, %cst_12 {dimension_numbers = #tpu.dot_dimension_numbers<[1], [0], [0], [1], [0, 0, 1, 1], [], []>} : vector<16x8xf32>, vector<8x128xf32>, vector<16x128xf32> -> vector<16x128xf32>
    %c0_13 = arith.constant 0 : index
    %c0_14 = arith.constant 0 : index
    %c0_15 = arith.constant 0 : index
    %25 = vector.load %arg9[%c0_13, %c0_14, %c0_15] : memref<8x1x128xf32, #tpu.memory_space<vmem>>, vector<1x1x128xf32>
    %26 = vector.shape_cast %25 : vector<1x1x128xf32> to vector<1x128xf32>
    %27 = vector.broadcast %26 : vector<1x128xf32> to vector<16x128xf32>
    %28 = arith.addf %24, %27 : vector<16x128xf32>
    %29 = arith.negf %28 : vector<16x128xf32>
    %30 = math.exp %29 : vector<16x128xf32>
    %cst_16 = arith.constant 1.000000e+00 : f32
    %31 = vector.broadcast %cst_16 : f32 to vector<16x128xf32>
    %32 = arith.addf %31, %30 : vector<16x128xf32>
    %33 = arith.divf %31, %32 : vector<16x128xf32>
    %34 = arith.mulf %28, %33 : vector<16x128xf32>
    %c0_17 = arith.constant 0 : index
    %c0_18 = arith.constant 0 : index
    %35 = vector.load %arg1[%c0_17, %c0_18] : memref<36x20xf32, #tpu.memory_space<vmem>>, vector<36x20xf32>
    %c0_19 = arith.constant 0 : index
    %c0_20 = arith.constant 0 : index
    %c0_21 = arith.constant 0 : index
    %36 = vector.load %arg6[%c0_19, %c0_20, %c0_21] : memref<3x20x128xf32, #tpu.memory_space<vmem>>, vector<1x20x128xf32>
    %37 = vector.shape_cast %36 : vector<1x20x128xf32> to vector<20x128xf32>
    %cst_22 = arith.constant dense<0.000000e+00> : vector<36x128xf32>
    %38 = tpu.matmul %35, %37, %cst_22 {dimension_numbers = #tpu.dot_dimension_numbers<[1], [0], [0], [1], [0, 0, 1, 1], [], []>} : vector<36x20xf32>, vector<20x128xf32>, vector<36x128xf32> -> vector<36x128xf32>
    %39 = arith.negf %38 : vector<36x128xf32>
    %40 = math.exp %39 : vector<36x128xf32>
    %cst_23 = arith.constant 1.000000e+00 : f32
    %41 = vector.broadcast %cst_23 : f32 to vector<36x128xf32>
    %42 = arith.addf %41, %40 : vector<36x128xf32>
    %43 = arith.divf %41, %42 : vector<36x128xf32>
    %44 = arith.mulf %38, %43 : vector<36x128xf32>
    %45 = arith.truncf %34 : vector<16x128xf32> to vector<16x128xbf16>
    %cst_24 = arith.constant dense<0.000000e+00> : vector<36x128xf32>
    %46 = tpu.matmul %7, %45, %cst_24 {dimension_numbers = #tpu.dot_dimension_numbers<[1], [0], [0], [1], [0, 0, 1, 1], [], []>} : vector<36x16xbf16>, vector<16x128xbf16>, vector<36x128xf32> -> vector<36x128xf32>
    %47 = arith.mulf %46, %44 : vector<36x128xf32>
    %48 = arith.truncf %47 : vector<36x128xf32> to vector<36x128xbf16>
    %cst_25 = arith.constant dense<0.000000e+00> : vector<16x128xf32>
    %49 = tpu.matmul %15, %48, %cst_25 {dimension_numbers = #tpu.dot_dimension_numbers<[1], [0], [0], [1], [0, 0, 1, 1], [], []>} : vector<16x36xbf16>, vector<36x128xbf16>, vector<16x128xf32> -> vector<16x128xf32>
    %50 = arith.addf %34, %49 : vector<16x128xf32>
    %c0_26 = arith.constant 0 : index
    %c0_27 = arith.constant 0 : index
    %c0_28 = arith.constant 0 : index
    %51 = vector.load %arg7[%c0_26, %c0_27, %c0_28] : memref<3x128x128xf32, #tpu.memory_space<vmem>>, vector<1x128x128xf32>
    %52 = vector.shape_cast %51 : vector<1x128x128xf32> to vector<128x128xf32>
    %cst_29 = arith.constant dense<0.000000e+00> : vector<16x128xf32>
    %53 = tpu.matmul %50, %52, %cst_29 {dimension_numbers = #tpu.dot_dimension_numbers<[1], [0], [0], [1], [0, 0, 1, 1], [], []>} : vector<16x128xf32>, vector<128x128xf32>, vector<16x128xf32> -> vector<16x128xf32>
    %c1 = arith.constant 1 : index
    %c0_30 = arith.constant 0 : index
    %c0_31 = arith.constant 0 : index
    %54 = vector.load %arg9[%c1, %c0_30, %c0_31] : memref<8x1x128xf32, #tpu.memory_space<vmem>>, vector<1x1x128xf32>
    %55 = vector.shape_cast %54 : vector<1x1x128xf32> to vector<1x128xf32>
    %56 = vector.broadcast %55 : vector<1x128xf32> to vector<16x128xf32>
    %57 = arith.addf %53, %56 : vector<16x128xf32>
    %cst_32 = arith.constant 0.000000e+00 : f32
    %58 = vector.broadcast %cst_32 : f32 to vector<16x128xf32>
    %59 = arith.cmpf oge, %57, %58 : vector<16x128xf32>
    %cst_33 = arith.constant 0.00999999977 : f32
    %60 = vector.broadcast %cst_33 : f32 to vector<16x128xf32>
    %61 = arith.mulf %60, %57 : vector<16x128xf32>
    %62 = arith.select %59, %57, %61 : vector<16x128xi1>, vector<16x128xf32>
    %c32_i32_34 = arith.constant 32 : i32
    %63 = tpu.dynamic_rotate %62 by %c32_i32_34 dim 1 : vector<16x128xf32>, i32 -> vector<16x128xf32>
    %64 = arith.addf %62, %63 : vector<16x128xf32>
    %c96_i32 = arith.constant 96 : i32
    %65 = tpu.dynamic_rotate %62 by %c96_i32 dim 1 : vector<16x128xf32>, i32 -> vector<16x128xf32>
    %66 = arith.addf %64, %65 : vector<16x128xf32>
    %67 = arith.mulf %66, %21 : vector<16x128xf32>
    %c32_i32_35 = arith.constant 32 : i32
    %68 = tpu.dynamic_rotate %67 by %c32_i32_35 dim 1 : vector<16x128xf32>, i32 -> vector<16x128xf32>
    %69 = arith.addf %67, %68 : vector<16x128xf32>
    %c96_i32_36 = arith.constant 96 : i32
    %70 = tpu.dynamic_rotate %67 by %c96_i32_36 dim 1 : vector<16x128xf32>, i32 -> vector<16x128xf32>
    %71 = arith.addf %69, %70 : vector<16x128xf32>
    %c0_37 = arith.constant 0 : index
    %c0_38 = arith.constant 0 : index
    %72 = vector.load %arg1[%c0_37, %c0_38] : memref<36x20xf32, #tpu.memory_space<vmem>>, vector<36x20xf32>
    %c1_39 = arith.constant 1 : index
    %c0_40 = arith.constant 0 : index
    %c0_41 = arith.constant 0 : index
    %73 = vector.load %arg6[%c1_39, %c0_40, %c0_41] : memref<3x20x128xf32, #tpu.memory_space<vmem>>, vector<1x20x128xf32>
    %74 = vector.shape_cast %73 : vector<1x20x128xf32> to vector<20x128xf32>
    %cst_42 = arith.constant dense<0.000000e+00> : vector<36x128xf32>
    %75 = tpu.matmul %72, %74, %cst_42 {dimension_numbers = #tpu.dot_dimension_numbers<[1], [0], [0], [1], [0, 0, 1, 1], [], []>} : vector<36x20xf32>, vector<20x128xf32>, vector<36x128xf32> -> vector<36x128xf32>
    %76 = arith.negf %75 : vector<36x128xf32>
    %77 = math.exp %76 : vector<36x128xf32>
    %cst_43 = arith.constant 1.000000e+00 : f32
    %78 = vector.broadcast %cst_43 : f32 to vector<36x128xf32>
    %79 = arith.addf %78, %77 : vector<36x128xf32>
    %80 = arith.divf %78, %79 : vector<36x128xf32>
    %81 = arith.mulf %75, %80 : vector<36x128xf32>
    %82 = arith.truncf %71 : vector<16x128xf32> to vector<16x128xbf16>
    %cst_44 = arith.constant dense<0.000000e+00> : vector<36x128xf32>
    %83 = tpu.matmul %7, %82, %cst_44 {dimension_numbers = #tpu.dot_dimension_numbers<[1], [0], [0], [1], [0, 0, 1, 1], [], []>} : vector<36x16xbf16>, vector<16x128xbf16>, vector<36x128xf32> -> vector<36x128xf32>
    %84 = arith.mulf %83, %81 : vector<36x128xf32>
    %85 = arith.truncf %84 : vector<36x128xf32> to vector<36x128xbf16>
    %cst_45 = arith.constant dense<0.000000e+00> : vector<16x128xf32>
    %86 = tpu.matmul %15, %85, %cst_45 {dimension_numbers = #tpu.dot_dimension_numbers<[1], [0], [0], [1], [0, 0, 1, 1], [], []>} : vector<16x36xbf16>, vector<36x128xbf16>, vector<16x128xf32> -> vector<16x128xf32>
    %87 = arith.addf %71, %86 : vector<16x128xf32>
    %c1_46 = arith.constant 1 : index
    %c0_47 = arith.constant 0 : index
    %c0_48 = arith.constant 0 : index
    %88 = vector.load %arg7[%c1_46, %c0_47, %c0_48] : memref<3x128x128xf32, #tpu.memory_space<vmem>>, vector<1x128x128xf32>
    %89 = vector.shape_cast %88 : vector<1x128x128xf32> to vector<128x128xf32>
    %cst_49 = arith.constant dense<0.000000e+00> : vector<16x128xf32>
    %90 = tpu.matmul %87, %89, %cst_49 {dimension_numbers = #tpu.dot_dimension_numbers<[1], [0], [0], [1], [0, 0, 1, 1], [], []>} : vector<16x128xf32>, vector<128x128xf32>, vector<16x128xf32> -> vector<16x128xf32>
    %c2 = arith.constant 2 : index
    %c0_50 = arith.constant 0 : index
    %c0_51 = arith.constant 0 : index
    %91 = vector.load %arg9[%c2, %c0_50, %c0_51] : memref<8x1x128xf32, #tpu.memory_space<vmem>>, vector<1x1x128xf32>
    %92 = vector.shape_cast %91 : vector<1x1x128xf32> to vector<1x128xf32>
    %93 = vector.broadcast %92 : vector<1x128xf32> to vector<16x128xf32>
    %94 = arith.addf %90, %93 : vector<16x128xf32>
    %cst_52 = arith.constant 0.000000e+00 : f32
    %95 = vector.broadcast %cst_52 : f32 to vector<16x128xf32>
    %96 = arith.cmpf oge, %94, %95 : vector<16x128xf32>
    %cst_53 = arith.constant 0.00999999977 : f32
    %97 = vector.broadcast %cst_53 : f32 to vector<16x128xf32>
    %98 = arith.mulf %97, %94 : vector<16x128xf32>
    %99 = arith.select %96, %94, %98 : vector<16x128xi1>, vector<16x128xf32>
    %c32_i32_54 = arith.constant 32 : i32
    %100 = tpu.dynamic_rotate %99 by %c32_i32_54 dim 1 : vector<16x128xf32>, i32 -> vector<16x128xf32>
    %101 = arith.addf %99, %100 : vector<16x128xf32>
    %c96_i32_55 = arith.constant 96 : i32
    %102 = tpu.dynamic_rotate %99 by %c96_i32_55 dim 1 : vector<16x128xf32>, i32 -> vector<16x128xf32>
    %103 = arith.addf %101, %102 : vector<16x128xf32>
    %104 = arith.mulf %103, %21 : vector<16x128xf32>
    %c32_i32_56 = arith.constant 32 : i32
    %105 = tpu.dynamic_rotate %104 by %c32_i32_56 dim 1 : vector<16x128xf32>, i32 -> vector<16x128xf32>
    %106 = arith.addf %104, %105 : vector<16x128xf32>
    %c96_i32_57 = arith.constant 96 : i32
    %107 = tpu.dynamic_rotate %104 by %c96_i32_57 dim 1 : vector<16x128xf32>, i32 -> vector<16x128xf32>
    %108 = arith.addf %106, %107 : vector<16x128xf32>
    %c0_58 = arith.constant 0 : index
    %c0_59 = arith.constant 0 : index
    %109 = vector.load %arg1[%c0_58, %c0_59] : memref<36x20xf32, #tpu.memory_space<vmem>>, vector<36x20xf32>
    %c2_60 = arith.constant 2 : index
    %c0_61 = arith.constant 0 : index
    %c0_62 = arith.constant 0 : index
    %110 = vector.load %arg6[%c2_60, %c0_61, %c0_62] : memref<3x20x128xf32, #tpu.memory_space<vmem>>, vector<1x20x128xf32>
    %111 = vector.shape_cast %110 : vector<1x20x128xf32> to vector<20x128xf32>
    %cst_63 = arith.constant dense<0.000000e+00> : vector<36x128xf32>
    %112 = tpu.matmul %109, %111, %cst_63 {dimension_numbers = #tpu.dot_dimension_numbers<[1], [0], [0], [1], [0, 0, 1, 1], [], []>} : vector<36x20xf32>, vector<20x128xf32>, vector<36x128xf32> -> vector<36x128xf32>
    %113 = arith.negf %112 : vector<36x128xf32>
    %114 = math.exp %113 : vector<36x128xf32>
    %cst_64 = arith.constant 1.000000e+00 : f32
    %115 = vector.broadcast %cst_64 : f32 to vector<36x128xf32>
    %116 = arith.addf %115, %114 : vector<36x128xf32>
    %117 = arith.divf %115, %116 : vector<36x128xf32>
    %118 = arith.mulf %112, %117 : vector<36x128xf32>
    %119 = arith.truncf %108 : vector<16x128xf32> to vector<16x128xbf16>
    %cst_65 = arith.constant dense<0.000000e+00> : vector<36x128xf32>
    %120 = tpu.matmul %7, %119, %cst_65 {dimension_numbers = #tpu.dot_dimension_numbers<[1], [0], [0], [1], [0, 0, 1, 1], [], []>} : vector<36x16xbf16>, vector<16x128xbf16>, vector<36x128xf32> -> vector<36x128xf32>
    %121 = arith.mulf %120, %118 : vector<36x128xf32>
    %122 = arith.truncf %121 : vector<36x128xf32> to vector<36x128xbf16>
    %cst_66 = arith.constant dense<0.000000e+00> : vector<16x128xf32>
    %123 = tpu.matmul %15, %122, %cst_66 {dimension_numbers = #tpu.dot_dimension_numbers<[1], [0], [0], [1], [0, 0, 1, 1], [], []>} : vector<16x36xbf16>, vector<36x128xbf16>, vector<16x128xf32> -> vector<16x128xf32>
    %124 = arith.addf %108, %123 : vector<16x128xf32>
    %c2_67 = arith.constant 2 : index
    %c0_68 = arith.constant 0 : index
    %c0_69 = arith.constant 0 : index
    %125 = vector.load %arg7[%c2_67, %c0_68, %c0_69] : memref<3x128x128xf32, #tpu.memory_space<vmem>>, vector<1x128x128xf32>
    %126 = vector.shape_cast %125 : vector<1x128x128xf32> to vector<128x128xf32>
    %cst_70 = arith.constant dense<0.000000e+00> : vector<16x128xf32>
    %127 = tpu.matmul %124, %126, %cst_70 {dimension_numbers = #tpu.dot_dimension_numbers<[1], [0], [0], [1], [0, 0, 1, 1], [], []>} : vector<16x128xf32>, vector<128x128xf32>, vector<16x128xf32> -> vector<16x128xf32>
    %c3 = arith.constant 3 : index
    %c0_71 = arith.constant 0 : index
    %c0_72 = arith.constant 0 : index
    %128 = vector.load %arg9[%c3, %c0_71, %c0_72] : memref<8x1x128xf32, #tpu.memory_space<vmem>>, vector<1x1x128xf32>
    %129 = vector.shape_cast %128 : vector<1x1x128xf32> to vector<1x128xf32>
    %130 = vector.broadcast %129 : vector<1x128xf32> to vector<16x128xf32>
    %131 = arith.addf %127, %130 : vector<16x128xf32>
    %cst_73 = arith.constant 0.000000e+00 : f32
    %132 = vector.broadcast %cst_73 : f32 to vector<16x128xf32>
    %133 = arith.cmpf oge, %131, %132 : vector<16x128xf32>
    %cst_74 = arith.constant 0.00999999977 : f32
    %134 = vector.broadcast %cst_74 : f32 to vector<16x128xf32>
    %135 = arith.mulf %134, %131 : vector<16x128xf32>
    %136 = arith.select %133, %131, %135 : vector<16x128xi1>, vector<16x128xf32>
    %c32_i32_75 = arith.constant 32 : i32
    %137 = tpu.dynamic_rotate %136 by %c32_i32_75 dim 1 : vector<16x128xf32>, i32 -> vector<16x128xf32>
    %138 = arith.addf %136, %137 : vector<16x128xf32>
    %c96_i32_76 = arith.constant 96 : i32
    %139 = tpu.dynamic_rotate %136 by %c96_i32_76 dim 1 : vector<16x128xf32>, i32 -> vector<16x128xf32>
    %140 = arith.addf %138, %139 : vector<16x128xf32>
    %141 = arith.mulf %140, %21 : vector<16x128xf32>
    %142 = tpu.iota {dimensions = array<i32: 0>} : vector<8x16xi32>
    %c0_77 = arith.constant 0 : index
    %c0_78 = arith.constant 0 : index
    %143 = vector.load %arg4[%c0_77, %c0_78] : memref<1x16xi32, #tpu.memory_space<vmem>>, vector<1x16xi32>
    %144 = vector.broadcast %143 : vector<1x16xi32> to vector<8x16xi32>
    %145 = arith.cmpi eq, %142, %144 : vector<8x16xi32>
    %cst_79 = arith.constant 1.000000e+00 : f32
    %cst_80 = arith.constant 0.000000e+00 : f32
    %146 = vector.broadcast %cst_79 : f32 to vector<8x16xf32>
    %147 = vector.broadcast %cst_80 : f32 to vector<8x16xf32>
    %148 = arith.select %145, %146, %147 : vector<8x16xi1>, vector<8x16xf32>
    %149 = arith.truncf %148 : vector<8x16xf32> to vector<8x16xbf16>
    %150 = arith.truncf %141 : vector<16x128xf32> to vector<16x128xbf16>
    %cst_81 = arith.constant dense<0.000000e+00> : vector<8x128xf32>
    %151 = tpu.matmul %149, %150, %cst_81 {dimension_numbers = #tpu.dot_dimension_numbers<[1], [0], [0], [1], [0, 0, 1, 1], [], []>} : vector<8x16xbf16>, vector<16x128xbf16>, vector<8x128xf32> -> vector<8x128xf32>
    %c0_82 = arith.constant 0 : index
    %c0_83 = arith.constant 0 : index
    %c0_84 = arith.constant 0 : index
    %152 = vector.load %arg8[%c0_82, %c0_83, %c0_84] : memref<4x128x128xf32, #tpu.memory_space<vmem>>, vector<1x128x128xf32>
    %153 = vector.shape_cast %152 : vector<1x128x128xf32> to vector<128x128xf32>
    %cst_85 = arith.constant dense<0.000000e+00> : vector<8x128xf32>
    %154 = tpu.matmul %151, %153, %cst_85 {dimension_numbers = #tpu.dot_dimension_numbers<[1], [0], [0], [1], [0, 0, 1, 1], [], []>} : vector<8x128xf32>, vector<128x128xf32>, vector<8x128xf32> -> vector<8x128xf32>
    %c4 = arith.constant 4 : index
    %c0_86 = arith.constant 0 : index
    %c0_87 = arith.constant 0 : index
    %155 = vector.load %arg9[%c4, %c0_86, %c0_87] : memref<8x1x128xf32, #tpu.memory_space<vmem>>, vector<1x1x128xf32>
    %156 = vector.shape_cast %155 : vector<1x1x128xf32> to vector<1x128xf32>
    %157 = vector.broadcast %156 : vector<1x128xf32> to vector<8x128xf32>
    %158 = arith.addf %154, %157 : vector<8x128xf32>
    %cst_88 = arith.constant 0.000000e+00 : f32
    %159 = vector.broadcast %cst_88 : f32 to vector<8x128xf32>
    %160 = arith.cmpf oge, %158, %159 : vector<8x128xf32>
    %cst_89 = arith.constant 0.00999999977 : f32
    %161 = vector.broadcast %cst_89 : f32 to vector<8x128xf32>
    %162 = arith.mulf %161, %158 : vector<8x128xf32>
    %163 = arith.select %160, %158, %162 : vector<8x128xi1>, vector<8x128xf32>
    %c1_90 = arith.constant 1 : index
    %c0_91 = arith.constant 0 : index
    %c0_92 = arith.constant 0 : index
    %164 = vector.load %arg8[%c1_90, %c0_91, %c0_92] : memref<4x128x128xf32, #tpu.memory_space<vmem>>, vector<1x128x128xf32>
    %165 = vector.shape_cast %164 : vector<1x128x128xf32> to vector<128x128xf32>
    %cst_93 = arith.constant dense<0.000000e+00> : vector<8x128xf32>
    %166 = tpu.matmul %163, %165, %cst_93 {dimension_numbers = #tpu.dot_dimension_numbers<[1], [0], [0], [1], [0, 0, 1, 1], [], []>} : vector<8x128xf32>, vector<128x128xf32>, vector<8x128xf32> -> vector<8x128xf32>
    %c5 = arith.constant 5 : index
    %c0_94 = arith.constant 0 : index
    %c0_95 = arith.constant 0 : index
    %167 = vector.load %arg9[%c5, %c0_94, %c0_95] : memref<8x1x128xf32, #tpu.memory_space<vmem>>, vector<1x1x128xf32>
    %168 = vector.shape_cast %167 : vector<1x1x128xf32> to vector<1x128xf32>
    %169 = vector.broadcast %168 : vector<1x128xf32> to vector<8x128xf32>
    %170 = arith.addf %166, %169 : vector<8x128xf32>
    %cst_96 = arith.constant 0.000000e+00 : f32
    %171 = vector.broadcast %cst_96 : f32 to vector<8x128xf32>
    %172 = arith.cmpf oge, %170, %171 : vector<8x128xf32>
    %cst_97 = arith.constant 0.00999999977 : f32
    %173 = vector.broadcast %cst_97 : f32 to vector<8x128xf32>
    %174 = arith.mulf %173, %170 : vector<8x128xf32>
    %175 = arith.select %172, %170, %174 : vector<8x128xi1>, vector<8x128xf32>
    %c2_98 = arith.constant 2 : index
    %c0_99 = arith.constant 0 : index
    %c0_100 = arith.constant 0 : index
    %176 = vector.load %arg8[%c2_98, %c0_99, %c0_100] : memref<4x128x128xf32, #tpu.memory_space<vmem>>, vector<1x128x128xf32>
    %177 = vector.shape_cast %176 : vector<1x128x128xf32> to vector<128x128xf32>
    %cst_101 = arith.constant dense<0.000000e+00> : vector<8x128xf32>
    %178 = tpu.matmul %175, %177, %cst_101 {dimension_numbers = #tpu.dot_dimension_numbers<[1], [0], [0], [1], [0, 0, 1, 1], [], []>} : vector<8x128xf32>, vector<128x128xf32>, vector<8x128xf32> -> vector<8x128xf32>
    %c6 = arith.constant 6 : index
    %c0_102 = arith.constant 0 : index
    %c0_103 = arith.constant 0 : index
    %179 = vector.load %arg9[%c6, %c0_102, %c0_103] : memref<8x1x128xf32, #tpu.memory_space<vmem>>, vector<1x1x128xf32>
    %180 = vector.shape_cast %179 : vector<1x1x128xf32> to vector<1x128xf32>
    %181 = vector.broadcast %180 : vector<1x128xf32> to vector<8x128xf32>
    %182 = arith.addf %178, %181 : vector<8x128xf32>
    %cst_104 = arith.constant 0.000000e+00 : f32
    %183 = vector.broadcast %cst_104 : f32 to vector<8x128xf32>
    %184 = arith.cmpf oge, %182, %183 : vector<8x128xf32>
    %cst_105 = arith.constant 0.00999999977 : f32
    %185 = vector.broadcast %cst_105 : f32 to vector<8x128xf32>
    %186 = arith.mulf %185, %182 : vector<8x128xf32>
    %187 = arith.select %184, %182, %186 : vector<8x128xi1>, vector<8x128xf32>
    %c3_106 = arith.constant 3 : index
    %c0_107 = arith.constant 0 : index
    %c0_108 = arith.constant 0 : index
    %188 = vector.load %arg8[%c3_106, %c0_107, %c0_108] : memref<4x128x128xf32, #tpu.memory_space<vmem>>, vector<1x128x128xf32>
    %189 = vector.shape_cast %188 : vector<1x128x128xf32> to vector<128x128xf32>
    %cst_109 = arith.constant dense<0.000000e+00> : vector<8x128xf32>
    %190 = tpu.matmul %187, %189, %cst_109 {dimension_numbers = #tpu.dot_dimension_numbers<[1], [0], [0], [1], [0, 0, 1, 1], [], []>} : vector<8x128xf32>, vector<128x128xf32>, vector<8x128xf32> -> vector<8x128xf32>
    %c7 = arith.constant 7 : index
    %c0_110 = arith.constant 0 : index
    %c0_111 = arith.constant 0 : index
    %191 = vector.load %arg9[%c7, %c0_110, %c0_111] : memref<8x1x128xf32, #tpu.memory_space<vmem>>, vector<1x1x128xf32>
    %192 = vector.shape_cast %191 : vector<1x1x128xf32> to vector<1x128xf32>
    %193 = vector.broadcast %192 : vector<1x128xf32> to vector<8x128xf32>
    %194 = arith.addf %190, %193 : vector<8x128xf32>
    %c0_112 = arith.constant 0 : index
    %c0_113 = arith.constant 0 : index
    %195 = vector.load %arg10[%c0_112, %c0_113] : memref<8x128xf32, #tpu.memory_space<vmem>>, vector<8x128xf32>
    tpu.vector_store %arg10[%c0_112, %c0_113], %194 {strides = array<i32>} : memref<8x128xf32, #tpu.memory_space<vmem>>, vector<8x128xf32>,
    return
  }
}

</mosaic_0001>

<llo_original>
// kernel: tpu_custom_call.1
$region0: #{tpu_custom_call.1}
  #allocation0 [shape = 'u32[]', space=smem, size = 0x4, offset = 0x4, fixed_abs, tag = 'smem constant byte address 0x4 - core index']
  #allocation1 [shape = 'u32[144,128]{1,0:T(1,128)}', space=vmem, size = 0x12000, scoped, tag = 'internal scratch']
  %s0 = inlined_call_operand.vmem [shape: f32[16,8], index: 0, kind: input, shape index: {}]
  %s1 = inlined_call_operand.vmem [shape: f32[36,20], index: 1, kind: input, shape index: {}]
  %s2 = inlined_call_operand.vmem [shape: s32[36,1], index: 2, kind: input, shape index: {}]
  %s3 = inlined_call_operand.vmem [shape: s32[1,36], index: 3, kind: input, shape index: {}]
  %s4 = inlined_call_operand.vmem [shape: s32[1,16], index: 4, kind: input, shape index: {}]
  %s5 = inlined_call_operand.vmem [shape: f32[8,128], index: 5, kind: input, shape index: {}]
  %s6 = inlined_call_operand.vmem [shape: f32[3,20,128], index: 6, kind: input, shape index: {}]
  %s7 = inlined_call_operand.hbm [shape: f32[3,128,128], index: 7, kind: input, shape index: {}]
  %s8 = inlined_call_operand.hbm [shape: f32[4,128,128], index: 8, kind: input, shape index: {}]
  %s9 = inlined_call_operand.vmem [shape: f32[8,1,128], index: 9, kind: input, shape index: {}]
  %s10 = inlined_call_operand.hbm [shape: f32[8,128], index: 10, kind: output, shape index: {}]
  %s11 = sld [smem:[#allocation0]]
  $region58: #{tpu_custom_call.1} parent=0
    _
  %s13 = ssub.s32 1, %s11
  %s14 = scalar_select 0, %s13, %s11
  $region1: #{tpu_custom_call.1} parent=0
    #allocation2 [shape = 'u8[196608]{0}', space=vmem, size = 0x30000, scoped, tag = 'input window, operand 7, single buffered']
    #allocation3 [shape = 's32[1]{0}', space=sflag, size = 0x4, scoped, tag = 'scoped memory for tpu_custom_call.1']
    #allocation4 [shape = 's32[1]{0}', space=sflag, size = 0x4, scoped, tag = 'scoped memory for tpu_custom_call.1']
    #allocation5 [shape = 'u8[262144]{0}', space=vmem, size = 0x40000, scoped, tag = 'input window, operand 8, single buffered']
    #allocation6 [shape = 's32[1]{0}', space=sflag, size = 0x4, scoped, tag = 'scoped memory for tpu_custom_call.1']
    #allocation7 [shape = 'u8[4096]{0}', space=vmem, size = 0x1000, scoped, tag = 'output window, operand 0, single buffered']
    %15 = vsyncpa [#allocation3], 0
    %16 = vsyncpa [#allocation6], 0
    %17 = vsyncpa [#allocation4], 0
    // Predicated region
    $region2: #{tpu_custom_call.1} parent=1 // pred_check
      _
    $region3: #{tpu_custom_call.1} parent=1 // pred_check_branch
      %19 = sbr.rel (0) target = $region5
    $region4: #{tpu_custom_call.1} parent=1 // pred_region
      _
    $region5: #{tpu_custom_call.1} parent=1 // pred_fallthru
      _
    // Predicated region
    $region6: #{tpu_custom_call.1} parent=1 // pred_check
      _
    $region7: #{tpu_custom_call.1} parent=1 // pred_check_branch
      %21 = sbr.rel (0) target = $region9
    $region8: #{tpu_custom_call.1} parent=1 // pred_region
      _
    $region9: #{tpu_custom_call.1} parent=1 // pred_fallthru
      _
    // Predicated region
    $region10: #{tpu_custom_call.1} parent=1 // pred_check
      _
    $region11: #{tpu_custom_call.1} parent=1 // pred_check_branch
      %23 = sbr.rel (0) target = $region13
    $region12: #{tpu_custom_call.1} parent=1 // pred_region
      _
    $region13: #{tpu_custom_call.1} parent=1 // pred_fallthru
      _
    // Predicated region
    $region14: #{tpu_custom_call.1} parent=1 // pred_check
      _
    $region15: #{tpu_custom_call.1} parent=1 // pred_check_branch
      %25 = sbr.rel (0) target = $region17
    $region16: #{tpu_custom_call.1} parent=1 // pred_region
      _
    $region17: #{tpu_custom_call.1} parent=1 // pred_fallthru
      _
    // Predicated region
    $region18: #{tpu_custom_call.1} parent=1 // pred_check
      _
    $region19: #{tpu_custom_call.1} parent=1 // pred_check_branch
      %27 = sbr.rel (0) target = $region21
    $region20: #{tpu_custom_call.1} parent=1 // pred_region
      _
    $region21: #{tpu_custom_call.1} parent=1 // pred_fallthru
      _
    // Predicated region
    $region22: #{tpu_custom_call.1} parent=1 // pred_check
      _
    $region23: #{tpu_custom_call.1} parent=1 // pred_check_branch
      %29 = sbr.rel (0) target = $region25
    $region24: #{tpu_custom_call.1} parent=1 // pred_region
      _
    $region25: #{tpu_custom_call.1} parent=1 // pred_fallthru
      _
    // Predicated region
    $region26: #{tpu_custom_call.1} parent=1 // pred_check
      _
    $region27: #{tpu_custom_call.1} parent=1 // pred_check_branch
      %31 = sbr.rel (0) target = $region29
    $region28: #{tpu_custom_call.1} parent=1 // pred_region
      _
    $region29: #{tpu_custom_call.1} parent=1 // pred_fallthru
      _
    // Predicated region
    $region30: #{tpu_custom_call.1} parent=1 // pred_check
      _
    $region31: #{tpu_custom_call.1} parent=1 // pred_check_branch
      %33 = sbr.rel (0) target = $region33
    $region32: #{tpu_custom_call.1} parent=1 // pred_region
      %s35 = ssub.s32 6144, 6144
      %36 = vsyncadd [#allocation3], %s35
      %s37 = sshll.u32 [#allocation2], 4
      %s38 = int_to_ptr.vmem [resolvable:$true] %s37
      %43 = dma.hbm_to_vmem [thread:$0]  %s7, 6144, %s38, [#allocation3], 128, 128, 8
    $region33: #{tpu_custom_call.1} parent=1 // pred_fallthru
      _
    // Predicated region
    $region34: #{tpu_custom_call.1} parent=1 // pred_check
      _
    $region35: #{tpu_custom_call.1} parent=1 // pred_check_branch
      %45 = sbr.rel (0) target = $region37
    $region36: #{tpu_custom_call.1} parent=1 // pred_region
      %s47 = ssub.s32 8192, 8192
      %48 = vsyncadd [#allocation6], %s47
      %s49 = sshll.u32 [#allocation5], 4
      %s50 = int_to_ptr.vmem [resolvable:$true] %s49
      %55 = dma.hbm_to_vmem [thread:$0]  %s8, 8192, %s50, [#allocation6], 128, 128, 8
    $region37: #{tpu_custom_call.1} parent=1 // pred_fallthru
      _
    // Predicated region
    $region38: #{tpu_custom_call.1} parent=1 // pred_check
      _
    $region39: #{tpu_custom_call.1} parent=1 // pred_check_branch
      %57 = sbr.rel (0) target = $region41
    $region40: #{tpu_custom_call.1} parent=1 // pred_region
      _
    $region41: #{tpu_custom_call.1} parent=1 // pred_fallthru
      _
    // Predicated region
    $region42: #{tpu_custom_call.1} parent=1 // pred_check
      _
    $region43: #{tpu_custom_call.1} parent=1 // pred_check_branch
      %59 = sbr.rel (0) target = $region45
    $region44: #{tpu_custom_call.1} parent=1 // pred_region
      %60 = dma.done [#allocation3], 6144
    $region45: #{tpu_custom_call.1} parent=1 // pred_fallthru
      _
    // Predicated region
    $region46: #{tpu_custom_call.1} parent=1 // pred_check
      _
    $region47: #{tpu_custom_call.1} parent=1 // pred_check_branch
      %62 = sbr.rel (0) target = $region49
    $region48: #{tpu_custom_call.1} parent=1 // pred_region
      %63 = dma.done [#allocation6], 8192
    $region49: #{tpu_custom_call.1} parent=1 // pred_fallthru
      _
    %v65 = vlaneseq
    %v66 = vand.u32 %v65, 127
    %v67 = vld [vmem:[%s2] sm:$0xff]
    %v68 = vld [vmem:[%s2 + $0x8] sm:$0xff]
    %v69 = vld [vmem:[%s2 + $0x10] sm:$0xff]
    %v70 = vld [vmem:[%s2 + $0x18] sm:$0xff]
    %v71 = vld [vmem:[%s2 + $0x20] sm:$0xf]
    %72 = vset.pattern.permute.xlu0 0
    %73 = vperm.xlu0 %72, %v67
    %v74 = vpop.permute.xlu0 %73
    %75 = vset.pattern.permute.xlu0 0
    %76 = vperm.xlu0 %75, %v68
    %v77 = vpop.permute.xlu0 %76
    %78 = vset.pattern.permute.xlu0 0
    %79 = vperm.xlu0 %78, %v69
    %v80 = vpop.permute.xlu0 %79
    %81 = vset.pattern.permute.xlu0 0
    %82 = vperm.xlu0 %81, %v70
    %v83 = vpop.permute.xlu0 %82
    %84 = vset.pattern.permute.xlu0 0
    %85 = vperm.xlu0 %84, %v71
    %v86 = vpop.permute.xlu0 %85
    %vm87 = vcmp.eq.s32.totalorder %v66, %v74
    %vm88 = vcmp.eq.s32.totalorder %v66, %v77
    %vm89 = vcmp.eq.s32.totalorder %v66, %v80
    %vm90 = vcmp.eq.s32.totalorder %v66, %v83
    %vm91 = vcmp.eq.s32.totalorder %v66, %v86
    %v92 = vsel %vm87, 1.0, 0.0
    %v93 = vsel %vm88, 1.0, 0.0
    %v94 = vsel %vm89, 1.0, 0.0
    %v95 = vsel %vm90, 1.0, 0.0
    %v96 = vsel %vm91, 1.0, 0.0
    %v97 = vpack.c.bf16 %v93, %v92
    %v98 = vpack.c.bf16 %v95, %v94
    %v99 = vpack.c.bf16 %v96, %v96
    %v100 = vlaneseq
    %v101 = vshrl.u32 %v100, 7
    %v102 = vadd.s32 %v101, 8
    %v103 = vld [vmem:[%s3] sm:$0x1]
    %v104 = vlaneseq
    %v105 = vshrl.u32 %v104, 7
    %v106 = vsub.s32 0, %v105
    %v107 = vrot.slane %v103, %v106
    %vm108 = vcmp.eq.s32.totalorder %v101, %v107
    %vm109 = vcmp.eq.s32.totalorder %v102, %v107
    %v110 = vsel %vm108, 1.0, 0.0
    %v111 = vsel %vm109, 1.0, 0.0
    %v112 = vpack.c.bf16 %v111, %v110
    %vm113 = vcmp.lt.s32.totalorder %v66, 32
    %v114 = vsel %vm113, 1.0, 0.0
    %v115 = vld [vmem:[%s0] sm:$0xff]
    %v116 = vld [vmem:[%s0 + $0x8] sm:$0xff]
    %v117 = vld [vmem:[%s5] sm:$0xff]
    %v118 = vld [vmem:[%s9] sm:$0x1]
    %v120 = vlaneseq
    %v121 = vshrl.u32 %v120, 7
    %v122 = vsub.s32 0, %v121
    %v123 = vrot.slane %v118, %v122
    %vm125 = vcmask 64512
    %v127 = vsel %vm125, %v115, 0
    %v130 = vsel %vm125, %v116, 0
    %132 = vmatprep.subr.mxu0 0.0
    %133 = vmatpush1.msra.mxu0 0.0
    %134 = vmatprep.subr.mxu0 0.0
    %135 = vmatpush1.msra.mxu0 0.0
    %136 = vmatprep.subr.mxu0 0.0
    %137 = vmatpush1.msra.mxu0 0.0
    %138 = vmatprep.subr.mxu0 0.0
    %139 = vmatpush1.msra.mxu0 0.0
    %140 = vmatprep.subr.mxu0 0.0
    %141 = vmatpush1.msra.mxu0 0.0
    %142 = vmatprep.subr.mxu0 0.0
    %143 = vmatpush1.msra.mxu0 0.0
    %144 = vmatprep.subr.mxu0 0.0
    %145 = vmatpush1.msra.mxu0 0.0
    %146 = vmatprep.subr.mxu0 0.0
    %147 = vmatpush1.msra.mxu0 0.0
    %148 = vmatprep.subr.mxu0 0.0
    %149 = vmatpush1.msra.mxu0 0.0
    %150 = vmatprep.subr.mxu0 0.0
    %151 = vmatpush1.msra.mxu0 0.0
    %152 = vmatprep.subr.mxu0 0.0
    %153 = vmatpush1.msra.mxu0 0.0
    %154 = vmatprep.subr.mxu0 0.0
    %155 = vmatpush1.msra.mxu0 0.0
    %156 = vmatprep.subr.mxu0 0.0
    %157 = vmatpush1.msra.mxu0 0.0
    %158 = vmatprep.subr.mxu0 0.0
    %159 = vmatpush1.msra.mxu0 0.0
    %160 = vmatprep.subr.mxu0 0.0
    %161 = vmatpush1.msra.mxu0 0.0
    %162 = vmatprep.subr.mxu0 0.0
    %163 = vmatpush1.msra.mxu0 %v117
    %164 = vmatprep.subr.mxu0 0.0
    %165 = vmatpush2.msra.mxu0 0.0
    %166 = vmatprep.subr.mxu0 0.0
    %167 = vmatpush2.msra.mxu0 0.0
    %168 = vmatprep.subr.mxu0 0.0
    %169 = vmatpush2.msra.mxu0 0.0
    %170 = vmatprep.subr.mxu0 0.0
    %171 = vmatpush2.msra.mxu0 0.0
    %172 = vmatprep.subr.mxu0 0.0
    %173 = vmatpush2.msra.mxu0 0.0
    %174 = vmatprep.subr.mxu0 0.0
    %175 = vmatpush2.msra.mxu0 0.0
    %176 = vmatprep.subr.mxu0 0.0
    %177 = vmatpush2.msra.mxu0 0.0
    %178 = vmatprep.subr.mxu0 0.0
    %179 = vmatpush2.msra.mxu0 0.0
    %180 = vmatprep.subr.mxu0 0.0
    %181 = vmatpush2.msra.mxu0 0.0
    %182 = vmatprep.subr.mxu0 0.0
    %183 = vmatpush2.msra.mxu0 0.0
    %184 = vmatprep.subr.mxu0 0.0
    %185 = vmatpush2.msra.mxu0 0.0
    %186 = vmatprep.subr.mxu0 0.0
    %187 = vmatpush2.msra.mxu0 0.0
    %188 = vmatprep.subr.mxu0 0.0
    %189 = vmatpush2.msra.mxu0 0.0
    %190 = vmatprep.subr.mxu0 0.0
    %191 = vmatpush2.msra.mxu0 0.0
    %192 = vmatprep.subr.mxu0 0.0
    %193 = vmatpush2.msra.mxu0 0.0
    %194 = vmatprep.subr.mxu0 0.0
    %195 = vmatpush2.msra.mxu0 0.0
    %196 = vmatprep.mubr.f32.mxu0 0.0
    %197 = vmatmul.mubr.f32.gmra.mxu0 %v127
    %v198 = vpop.f32.mrf.mxu0
    %v199 = vadd.f32 %v123, %v198
    %v200 = vpop.f32.mrf.mxu0
    %201 = vmatprep.mubr.f32.mxu0 0.0
    %202 = vmatmul.mubr.f32.gmra.mxu0 %v130
    %v203 = vpop.f32.mrf.mxu0
    %v204 = vadd.f32 %v123, %v203
    %v205 = vpop.f32.mrf.mxu0
    %206 = vdwg.mxu0
    %v207 = vxor.u32 %v199, 2147483648
    %v208 = vxor.u32 %v204, 2147483648
    %v209 = vmul.f32 %v207, 1.442695
    %v210 = vpow.pop %v209
    %v211 = vmul.f32 %v208, 1.442695
    %v212 = vpow.pop %v211
    %v213 = vadd.f32 %v210, 1.0
    %v214 = vadd.f32 %v212, 1.0
    %v215 = vrcp.pop %v213
    %v216 = vmul.f32 1.0, %v215
    %v217 = vrcp.pop %v214
    %v218 = vmul.f32 1.0, %v217
    %v219 = vmul.f32 %v199, %v216
    %v220 = vmul.f32 %v204, %v218
    %v221 = vld [vmem:[%s1] sm:$0xff]
    %v222 = vld [vmem:[%s1 + $0x8] sm:$0xff]
    %v223 = vld [vmem:[%s1 + $0x10] sm:$0xff]
    %v224 = vld [vmem:[%s1 + $0x18] sm:$0xff]
    %v225 = vld [vmem:[%s1 + $0x20] sm:$0xf]
    %v226 = vld [vmem:[%s6] sm:$0xff]
    %v227 = vld [vmem:[%s6 + $0x8] sm:$0xff]
    %v228 = vld [vmem:[%s6 + $0x10] sm:$0xf]
    %vm229 = vcmask 162816
    %v231 = vsel %vm229, %v221, 0
    %v234 = vsel %vm229, %v222, 0
    %v237 = vsel %vm229, %v223, 0
    %v240 = vsel %vm229, %v224, 0
    %v243 = vsel %vm229, %v225, 0
    %vm245 = vcmask 1043456
    %v247 = vsel %vm245, %v228, 0
    %249 = vmatprep.subr.mxu0 0.0
    %250 = vmatpush1.msra.mxu0 0.0
    %251 = vmatprep.subr.mxu0 0.0
    %252 = vmatpush1.msra.mxu0 0.0
    %253 = vmatprep.subr.mxu0 0.0
    %254 = vmatpush1.msra.mxu0 0.0
    %255 = vmatprep.subr.mxu0 0.0
    %256 = vmatpush1.msra.mxu0 0.0
    %257 = vmatprep.subr.mxu0 0.0
    %258 = vmatpush1.msra.mxu0 0.0
    %259 = vmatprep.subr.mxu0 0.0
    %260 = vmatpush1.msra.mxu0 0.0
    %261 = vmatprep.subr.mxu0 0.0
    %262 = vmatpush1.msra.mxu0 0.0
    %263 = vmatprep.subr.mxu0 0.0
    %264 = vmatpush1.msra.mxu0 0.0
    %265 = vmatprep.subr.mxu0 0.0
    %266 = vmatpush1.msra.mxu0 0.0
    %267 = vmatprep.subr.mxu0 0.0
    %268 = vmatpush1.msra.mxu0 0.0
    %269 = vmatprep.subr.mxu0 0.0
    %270 = vmatpush1.msra.mxu0 0.0
    %271 = vmatprep.subr.mxu0 0.0
    %272 = vmatpush1.msra.mxu0 0.0
    %273 = vmatprep.subr.mxu0 0.0
    %274 = vmatpush1.msra.mxu0 0.0
    %275 = vmatprep.subr.mxu0 0.0
    %276 = vmatpush1.msra.mxu0 %v247
    %277 = vmatprep.subr.mxu0 0.0
    %278 = vmatpush1.msra.mxu0 %v227
    %279 = vmatprep.subr.mxu0 0.0
    %280 = vmatpush1.msra.mxu0 %v226
    %281 = vmatprep.subr.mxu0 0.0
    %282 = vmatpush2.msra.mxu0 0.0
    %283 = vmatprep.subr.mxu0 0.0
    %284 = vmatpush2.msra.mxu0 0.0
    %285 = vmatprep.subr.mxu0 0.0
    %286 = vmatpush2.msra.mxu0 0.0
    %287 = vmatprep.subr.mxu0 0.0
    %288 = vmatpush2.msra.mxu0 0.0
    %289 = vmatprep.subr.mxu0 0.0
    %290 = vmatpush2.msra.mxu0 0.0
    %291 = vmatprep.subr.mxu0 0.0
    %292 = vmatpush2.msra.mxu0 0.0
    %293 = vmatprep.subr.mxu0 0.0
    %294 = vmatpush2.msra.mxu0 0.0
    %295 = vmatprep.subr.mxu0 0.0
    %296 = vmatpush2.msra.mxu0 0.0
    %297 = vmatprep.subr.mxu0 0.0
    %298 = vmatpush2.msra.mxu0 0.0
    %299 = vmatprep.subr.mxu0 0.0
    %300 = vmatpush2.msra.mxu0 0.0
    %301 = vmatprep.subr.mxu0 0.0
    %302 = vmatpush2.msra.mxu0 0.0
    %303 = vmatprep.subr.mxu0 0.0
    %304 = vmatpush2.msra.mxu0 0.0
    %305 = vmatprep.subr.mxu0 0.0
    %306 = vmatpush2.msra.mxu0 0.0
    %307 = vmatprep.subr.mxu0 0.0
    %308 = vmatpush2.msra.mxu0 0.0
    %309 = vmatprep.subr.mxu0 0.0
    %310 = vmatpush2.msra.mxu0 0.0
    %311 = vmatprep.subr.mxu0 0.0
    %312 = vmatpush2.msra.mxu0 0.0
    %313 = vmatprep.mubr.f32.mxu0 0.0
    %314 = vmatmul.mubr.f32.gmra.mxu0 %v231
    %v315 = vpop.f32.mrf.mxu0
    %v316 = vadd.f32 0.0, %v315
    %v317 = vpop.f32.mrf.mxu0
    %318 = vmatprep.mubr.f32.mxu0 0.0
    %319 = vmatmul.mubr.f32.gmra.mxu0 %v234
    %v320 = vpop.f32.mrf.mxu0
    %v321 = vadd.f32 0.0, %v320
    %v322 = vpop.f32.mrf.mxu0
    %323 = vmatprep.mubr.f32.mxu0 0.0
    %324 = vmatmul.mubr.f32.gmra.mxu0 %v237
    %v325 = vpop.f32.mrf.mxu0
    %v326 = vadd.f32 0.0, %v325
    %v327 = vpop.f32.mrf.mxu0
    %328 = vmatprep.mubr.f32.mxu0 0.0
    %329 = vmatmul.mubr.f32.gmra.mxu0 %v240
    %v330 = vpop.f32.mrf.mxu0
    %v331 = vadd.f32 0.0, %v330
    %v332 = vpop.f32.mrf.mxu0
    %333 = vmatprep.mubr.f32.mxu0 0.0
    %334 = vmatmul.mubr.f32.gmra.mxu0 %v243
    %v335 = vpop.f32.mrf.mxu0
    %v336 = vadd.f32 0.0, %v335
    %v337 = vpop.f32.mrf.mxu0
    %338 = vdwg.mxu0
    %v339 = vxor.u32 %v316, 2147483648
    %v340 = vxor.u32 %v321, 2147483648
    %v341 = vxor.u32 %v326, 2147483648
    %v342 = vxor.u32 %v331, 2147483648
    %v343 = vxor.u32 %v336, 2147483648
    %v344 = vmul.f32 %v339, 1.442695
    %v345 = vpow.pop %v344
    %v346 = vmul.f32 %v340, 1.442695
    %v347 = vpow.pop %v346
    %v348 = vmul.f32 %v341, 1.442695
    %v349 = vpow.pop %v348
    %v350 = vmul.f32 %v342, 1.442695
    %v351 = vpow.pop %v350
    %v352 = vmul.f32 %v343, 1.442695
    %v353 = vpow.pop %v352
    %v354 = vadd.f32 %v345, 1.0
    %v355 = vadd.f32 %v347, 1.0
    %v356 = vadd.f32 %v349, 1.0
    %v357 = vadd.f32 %v351, 1.0
    %v358 = vadd.f32 %v353, 1.0
    %v359 = vrcp.pop %v354
    %v360 = vmul.f32 1.0, %v359
    %v361 = vrcp.pop %v355
    %v362 = vmul.f32 1.0, %v361
    %v363 = vrcp.pop %v356
    %v364 = vmul.f32 1.0, %v363
    %v365 = vrcp.pop %v357
    %v366 = vmul.f32 1.0, %v365
    %v367 = vrcp.pop %v358
    %v368 = vmul.f32 1.0, %v367
    %v369 = vmul.f32 %v316, %v360
    %v370 = vmul.f32 %v321, %v362
    %v371 = vmul.f32 %v326, %v364
    %v372 = vmul.f32 %v331, %v366
    %v373 = vmul.f32 %v336, %v368
    %v374 = vpack.c.bf16 %v220, %v219
    %vm375 = vcmask 130048
    %v377 = vsel %vm375, %v97, 0
    %v380 = vsel %vm375, %v98, 0
    %v383 = vsel %vm375, %v99, 0
    %385 = vmatprep.subr.bf16.mxu0 0
    %386 = vmatpush1.bf16.msra.mxu0 0
    %387 = vmatprep.subr.bf16.mxu0 0
    %388 = vmatpush1.bf16.msra.mxu0 0
    %389 = vmatprep.subr.bf16.mxu0 0
    %390 = vmatpush1.bf16.msra.mxu0 0
    %391 = vmatprep.subr.bf16.mxu0 0
    %392 = vmatpush1.bf16.msra.mxu0 0
    %393 = vmatprep.subr.bf16.mxu0 0
    %394 = vmatpush1.bf16.msra.mxu0 0
    %395 = vmatprep.subr.bf16.mxu0 0
    %396 = vmatpush1.bf16.msra.mxu0 0
    %397 = vmatprep.subr.bf16.mxu0 0
    %398 = vmatpush1.bf16.msra.mxu0 0
    %399 = vmatprep.subr.bf16.mxu0 0
    %400 = vmatpush1.bf16.msra.mxu0 %v374
    %401 = vmatprep.subr.bf16.mxu0 0
    %402 = vmatpush2.bf16.msra.mxu0 0
    %403 = vmatprep.subr.bf16.mxu0 0
    %404 = vmatpush2.bf16.msra.mxu0 0
    %405 = vmatprep.subr.bf16.mxu0 0
    %406 = vmatpush2.bf16.msra.mxu0 0
    %407 = vmatprep.subr.bf16.mxu0 0
    %408 = vmatpush2.bf16.msra.mxu0 0
    %409 = vmatprep.subr.bf16.mxu0 0
    %410 = vmatpush2.bf16.msra.mxu0 0
    %411 = vmatprep.subr.bf16.mxu0 0
    %412 = vmatpush2.bf16.msra.mxu0 0
    %413 = vmatprep.subr.bf16.mxu0 0
    %414 = vmatpush2.bf16.msra.mxu0 0
    %415 = vmatprep.subr.bf16.mxu0 0
    %416 = vmatpush2.bf16.msra.mxu0 0
    %417 = vmatprep.mubr.bf16.mxu0 0
    %418 = vmatmul.mubr.bf16.gmra.mxu0 %v377
    %v419 = vpop.f32.mrf.mxu0
    %v420 = vadd.f32 0.0, %v419
    %v421 = vpop.f32.mrf.mxu0
    %v422 = vpop.f32.mrf.mxu0
    %v423 = vadd.f32 0.0, %v422
    %v424 = vpop.f32.mrf.mxu0
    %425 = vmatprep.mubr.bf16.mxu0 0
    %426 = vmatmul.mubr.bf16.gmra.mxu0 %v380
    %v427 = vpop.f32.mrf.mxu0
    %v428 = vadd.f32 0.0, %v427
    %v429 = vpop.f32.mrf.mxu0
    %v430 = vpop.f32.mrf.mxu0
    %v431 = vadd.f32 0.0, %v430
    %v432 = vpop.f32.mrf.mxu0
    %433 = vmatprep.mubr.bf16.mxu0 0
    %434 = vmatmul.mubr.bf16.gmra.mxu0 %v383
    %v435 = vpop.f32.mrf.mxu0
    %v436 = vadd.f32 0.0, %v435
    %v437 = vpop.f32.mrf.mxu0
    %v438 = vpop.f32.mrf.mxu0
    %v439 = vpop.f32.mrf.mxu0
    %440 = vdwg.mxu0
    %v441 = vmul.f32 %v420, %v369
    %v442 = vmul.f32 %v423, %v370
    %v443 = vmul.f32 %v428, %v371
    %v444 = vmul.f32 %v431, %v372
    %v445 = vmul.f32 %v436, %v373
    %v446 = vpack.c.bf16 %v442, %v441
    %v447 = vpack.c.bf16 %v444, %v443
    %v448 = vpack.c.bf16 %v445, %v445
    %vm449 = vcmask 293888
    %v451 = vsel %vm449, %v112, 0
    %vm453 = vcmask 1041408
    %v455 = vsel %vm453, %v448, 0
    %457 = vmatprep.subr.bf16.mxu0 0
    %458 = vmatpush1.bf16.msra.mxu0 0
    %459 = vmatprep.subr.bf16.mxu0 0
    %460 = vmatpush1.bf16.msra.mxu0 0
    %461 = vmatprep.subr.bf16.mxu0 0
    %462 = vmatpush1.bf16.msra.mxu0 0
    %463 = vmatprep.subr.bf16.mxu0 0
    %464 = vmatpush1.bf16.msra.mxu0 0
    %465 = vmatprep.subr.bf16.mxu0 0
    %466 = vmatpush1.bf16.msra.mxu0 0
    %467 = vmatprep.subr.bf16.mxu0 0
    %468 = vmatpush1.bf16.msra.mxu0 %v455
    %469 = vmatprep.subr.bf16.mxu0 0
    %470 = vmatpush1.bf16.msra.mxu0 %v447
    %471 = vmatprep.subr.bf16.mxu0 0
    %472 = vmatpush1.bf16.msra.mxu0 %v446
    %473 = vmatprep.subr.bf16.mxu0 0
    %474 = vmatpush2.bf16.msra.mxu0 0
    %475 = vmatprep.subr.bf16.mxu0 0
    %476 = vmatpush2.bf16.msra.mxu0 0
    %477 = vmatprep.subr.bf16.mxu0 0
    %478 = vmatpush2.bf16.msra.mxu0 0
    %479 = vmatprep.subr.bf16.mxu0 0
    %480 = vmatpush2.bf16.msra.mxu0 0
    %481 = vmatprep.subr.bf16.mxu0 0
    %482 = vmatpush2.bf16.msra.mxu0 0
    %483 = vmatprep.subr.bf16.mxu0 0
    %484 = vmatpush2.bf16.msra.mxu0 0
    %485 = vmatprep.subr.bf16.mxu0 0
    %486 = vmatpush2.bf16.msra.mxu0 0
    %487 = vmatprep.subr.bf16.mxu0 0
    %488 = vmatpush2.bf16.msra.mxu0 0
    %489 = vmatprep.mubr.bf16.mxu0 0
    %490 = vmatmul.mubr.bf16.gmra.mxu0 %v451
    %v491 = vpop.f32.mrf.mxu0
    %v492 = vadd.f32 0.0, %v491
    %v493 = vpop.f32.mrf.mxu0
    %v494 = vpop.f32.mrf.mxu0
    %v495 = vadd.f32 0.0, %v494
    %v496 = vpop.f32.mrf.mxu0
    %497 = vdwg.mxu0
    %v498 = vadd.f32 %v219, %v492
    %v499 = vadd.f32 %v220, %v495
    %v500 = vld [vmem:[#allocation2] sm:$0xff]
    %v501 = vld [vmem:[#allocation2 + $0x8] sm:$0xff]
    %v502 = vld [vmem:[#allocation2 + $0x10] sm:$0xff]
    %v503 = vld [vmem:[#allocation2 + $0x18] sm:$0xff]
    %v504 = vld [vmem:[#allocation2 + $0x20] sm:$0xff]
    %v505 = vld [vmem:[#allocation2 + $0x28] sm:$0xff]
    %v506 = vld [vmem:[#allocation2 + $0x30] sm:$0xff]
    %v507 = vld [vmem:[#allocation2 + $0x38] sm:$0xff]
    %v508 = vld [vmem:[#allocation2 + $0x40] sm:$0xff]
    %v509 = vld [vmem:[#allocation2 + $0x48] sm:$0xff]
    %v510 = vld [vmem:[#allocation2 + $0x50] sm:$0xff]
    %v511 = vld [vmem:[#allocation2 + $0x58] sm:$0xff]
    %v512 = vld [vmem:[#allocation2 + $0x60] sm:$0xff]
    %v513 = vld [vmem:[#allocation2 + $0x68] sm:$0xff]
    %v514 = vld [vmem:[#allocation2 + $0x70] sm:$0xff]
    %v515 = vld [vmem:[#allocation2 + $0x78] sm:$0xff]
    %s516 = scalar_lea.vmem %s9, 1
    %v517 = vld [vmem:[%s516] sm:$0x1]
    %v519 = vlaneseq
    %v520 = vshrl.u32 %v519, 7
    %v521 = vsub.s32 0, %v520
    %v522 = vrot.slane %v517, %v521
    %524 = vmatprep.subr.mxu0 0.0
    %525 = vmatpush1.msra.mxu0 %v515
    %526 = vmatprep.subr.mxu0 0.0
    %527 = vmatpush1.msra.mxu0 %v514
    %528 = vmatprep.subr.mxu0 0.0
    %529 = vmatpush1.msra.mxu0 %v513
    %530 = vmatprep.subr.mxu0 0.0
    %531 = vmatpush1.msra.mxu0 %v512
    %532 = vmatprep.subr.mxu0 0.0
    %533 = vmatpush1.msra.mxu0 %v511
    %534 = vmatprep.subr.mxu0 0.0
    %535 = vmatpush1.msra.mxu0 %v510
    %536 = vmatprep.subr.mxu0 0.0
    %537 = vmatpush1.msra.mxu0 %v509
    %538 = vmatprep.subr.mxu0 0.0
    %539 = vmatpush1.msra.mxu0 %v508
    %540 = vmatprep.subr.mxu0 0.0
    %541 = vmatpush1.msra.mxu0 %v507
    %542 = vmatprep.subr.mxu0 0.0
    %543 = vmatpush1.msra.mxu0 %v506
    %544 = vmatprep.subr.mxu0 0.0
    %545 = vmatpush1.msra.mxu0 %v505
    %546 = vmatprep.subr.mxu0 0.0
    %547 = vmatpush1.msra.mxu0 %v504
    %548 = vmatprep.subr.mxu0 0.0
    %549 = vmatpush1.msra.mxu0 %v503
    %550 = vmatprep.subr.mxu0 0.0
    %551 = vmatpush1.msra.mxu0 %v502
    %552 = vmatprep.subr.mxu0 0.0
    %553 = vmatpush1.msra.mxu0 %v501
    %554 = vmatprep.subr.mxu0 0.0
    %555 = vmatpush1.msra.mxu0 %v500
    %556 = vmatprep.subr.mxu0 0.0
    %557 = vmatpush2.msra.mxu0 0.0
    %558 = vmatprep.subr.mxu0 0.0
    %559 = vmatpush2.msra.mxu0 0.0
    %560 = vmatprep.subr.mxu0 0.0
    %561 = vmatpush2.msra.mxu0 0.0
    %562 = vmatprep.subr.mxu0 0.0
    %563 = vmatpush2.msra.mxu0 0.0
    %564 = vmatprep.subr.mxu0 0.0
    %565 = vmatpush2.msra.mxu0 0.0
    %566 = vmatprep.subr.mxu0 0.0
    %567 = vmatpush2.msra.mxu0 0.0
    %568 = vmatprep.subr.mxu0 0.0
    %569 = vmatpush2.msra.mxu0 0.0
    %570 = vmatprep.subr.mxu0 0.0
    %571 = vmatpush2.msra.mxu0 0.0
    %572 = vmatprep.subr.mxu0 0.0
    %573 = vmatpush2.msra.mxu0 0.0
    %574 = vmatprep.subr.mxu0 0.0
    %575 = vmatpush2.msra.mxu0 0.0
    %576 = vmatprep.subr.mxu0 0.0
    %577 = vmatpush2.msra.mxu0 0.0
    %578 = vmatprep.subr.mxu0 0.0
    %579 = vmatpush2.msra.mxu0 0.0
    %580 = vmatprep.subr.mxu0 0.0
    %581 = vmatpush2.msra.mxu0 0.0
    %582 = vmatprep.subr.mxu0 0.0
    %583 = vmatpush2.msra.mxu0 0.0
    %584 = vmatprep.subr.mxu0 0.0
    %585 = vmatpush2.msra.mxu0 0.0
    %586 = vmatprep.subr.mxu0 0.0
    %587 = vmatpush2.msra.mxu0 0.0
    %588 = vmatprep.mubr.f32.mxu0 0.0
    %589 = vmatmul.mubr.f32.gmra.mxu0 %v498
    %v590 = vpop.f32.mrf.mxu0
    %v591 = vadd.f32 %v522, %v590
    %v592 = vpop.f32.mrf.mxu0
    %593 = vmatprep.mubr.f32.mxu0 0.0
    %594 = vmatmul.mubr.f32.gmra.mxu0 %v499
    %v595 = vpop.f32.mrf.mxu0
    %v596 = vadd.f32 %v522, %v595
    %v597 = vpop.f32.mrf.mxu0
    %598 = vdwg.mxu0
    %vm599 = vcmp.ge.f32.partialorder %v591, 0.0
    %vm600 = vcmp.ge.f32.partialorder %v596, 0.0
    %v601 = vmul.f32 %v591, 0.01
    %v602 = vmul.f32 %v596, 0.01
    %v603 = vsel %vm599, %v591, %v601
    %v604 = vsel %vm600, %v596, %v602
    %605 = vrot.lane.b32.xlu0 %v603, 32
    %v606 = vpop.permute.xlu0 %605
    %607 = vrot.lane.b32.xlu0 %v604, 32
    %v608 = vpop.permute.xlu0 %607
    %v609 = vadd.f32 %v603, %v606
    %v610 = vadd.f32 %v604, %v608
    %611 = vrot.lane.b32.xlu0 %v603, 96
    %v612 = vpop.permute.xlu0 %611
    %613 = vrot.lane.b32.xlu0 %v604, 96
    %v614 = vpop.permute.xlu0 %613
    %v615 = vadd.f32 %v609, %v612
    %v616 = vadd.f32 %v610, %v614
    %v617 = vmul.f32 %v615, %v114
    %v618 = vmul.f32 %v616, %v114
    %619 = vrot.lane.b32.xlu0 %v617, 32
    %v620 = vpop.permute.xlu0 %619
    %621 = vrot.lane.b32.xlu0 %v618, 32
    %v622 = vpop.permute.xlu0 %621
    %v623 = vadd.f32 %v617, %v620
    %v624 = vadd.f32 %v618, %v622
    %625 = vrot.lane.b32.xlu0 %v617, 96
    %v626 = vpop.permute.xlu0 %625
    %627 = vrot.lane.b32.xlu0 %v618, 96
    %v628 = vpop.permute.xlu0 %627
    %v629 = vadd.f32 %v623, %v626
    %v630 = vadd.f32 %v624, %v628
    %s631 = scalar_lea.vmem %s6, 24
    %v632 = vld [vmem:[%s631] sm:$0xff]
    %v633 = vld [vmem:[%s631 + $0x8] sm:$0xff]
    %v634 = vld [vmem:[%s631 + $0x10] sm:$0xf]
    %v636 = vsel %vm245, %v634, 0
    %638 = vmatprep.subr.mxu0 0.0
    %639 = vmatpush1.msra.mxu0 0.0
    %640 = vmatprep.subr.mxu0 0.0
    %641 = vmatpush1.msra.mxu0 0.0
    %642 = vmatprep.subr.mxu0 0.0
    %643 = vmatpush1.msra.mxu0 0.0
    %644 = vmatprep.subr.mxu0 0.0
    %645 = vmatpush1.msra.mxu0 0.0
    %646 = vmatprep.subr.mxu0 0.0
    %647 = vmatpush1.msra.mxu0 0.0
    %648 = vmatprep.subr.mxu0 0.0
    %649 = vmatpush1.msra.mxu0 0.0
    %650 = vmatprep.subr.mxu0 0.0
    %651 = vmatpush1.msra.mxu0 0.0
    %652 = vmatprep.subr.mxu0 0.0
    %653 = vmatpush1.msra.mxu0 0.0
    %654 = vmatprep.subr.mxu0 0.0
    %655 = vmatpush1.msra.mxu0 0.0
    %656 = vmatprep.subr.mxu0 0.0
    %657 = vmatpush1.msra.mxu0 0.0
    %658 = vmatprep.subr.mxu0 0.0
    %659 = vmatpush1.msra.mxu0 0.0
    %660 = vmatprep.subr.mxu0 0.0
    %661 = vmatpush1.msra.mxu0 0.0
    %662 = vmatprep.subr.mxu0 0.0
    %663 = vmatpush1.msra.mxu0 0.0
    %664 = vmatprep.subr.mxu0 0.0
    %665 = vmatpush1.msra.mxu0 %v636
    %666 = vmatprep.subr.mxu0 0.0
    %667 = vmatpush1.msra.mxu0 %v633
    %668 = vmatprep.subr.mxu0 0.0
    %669 = vmatpush1.msra.mxu0 %v632
    %670 = vmatprep.subr.mxu0 0.0
    %671 = vmatpush2.msra.mxu0 0.0
    %672 = vmatprep.subr.mxu0 0.0
    %673 = vmatpush2.msra.mxu0 0.0
    %674 = vmatprep.subr.mxu0 0.0
    %675 = vmatpush2.msra.mxu0 0.0
    %676 = vmatprep.subr.mxu0 0.0
    %677 = vmatpush2.msra.mxu0 0.0
    %678 = vmatprep.subr.mxu0 0.0
    %679 = vmatpush2.msra.mxu0 0.0
    %680 = vmatprep.subr.mxu0 0.0
    %681 = vmatpush2.msra.mxu0 0.0
    %682 = vmatprep.subr.mxu0 0.0
    %683 = vmatpush2.msra.mxu0 0.0
    %684 = vmatprep.subr.mxu0 0.0
    %685 = vmatpush2.msra.mxu0 0.0
    %686 = vmatprep.subr.mxu0 0.0
    %687 = vmatpush2.msra.mxu0 0.0
    %688 = vmatprep.subr.mxu0 0.0
    %689 = vmatpush2.msra.mxu0 0.0
    %690 = vmatprep.subr.mxu0 0.0
    %691 = vmatpush2.msra.mxu0 0.0
    %692 = vmatprep.subr.mxu0 0.0
    %693 = vmatpush2.msra.mxu0 0.0
    %694 = vmatprep.subr.mxu0 0.0
    %695 = vmatpush2.msra.mxu0 0.0
    %696 = vmatprep.subr.mxu0 0.0
    %697 = vmatpush2.msra.mxu0 0.0
    %698 = vmatprep.subr.mxu0 0.0
    %699 = vmatpush2.msra.mxu0 0.0
    %700 = vmatprep.subr.mxu0 0.0
    %701 = vmatpush2.msra.mxu0 0.0
    %702 = vmatprep.mubr.f32.mxu0 0.0
    %703 = vmatmul.mubr.f32.gmra.mxu0 %v231
    %v704 = vpop.f32.mrf.mxu0
    %v705 = vadd.f32 0.0, %v704
    %v706 = vpop.f32.mrf.mxu0
    %707 = vmatprep.mubr.f32.mxu0 0.0
    %708 = vmatmul.mubr.f32.gmra.mxu0 %v234
    %v709 = vpop.f32.mrf.mxu0
    %v710 = vadd.f32 0.0, %v709
    %v711 = vpop.f32.mrf.mxu0
    %712 = vmatprep.mubr.f32.mxu0 0.0
    %713 = vmatmul.mubr.f32.gmra.mxu0 %v237
    %v714 = vpop.f32.mrf.mxu0
    %v715 = vadd.f32 0.0, %v714
    %v716 = vpop.f32.mrf.mxu0
    %717 = vmatprep.mubr.f32.mxu0 0.0
    %718 = vmatmul.mubr.f32.gmra.mxu0 %v240
    %v719 = vpop.f32.mrf.mxu0
    %v720 = vadd.f32 0.0, %v719
    %v721 = vpop.f32.mrf.mxu0
    %722 = vmatprep.mubr.f32.mxu0 0.0
    %723 = vmatmul.mubr.f32.gmra.mxu0 %v243
    %v724 = vpop.f32.mrf.mxu0
    %v725 = vadd.f32 0.0, %v724
    %v726 = vpop.f32.mrf.mxu0
    %727 = vdwg.mxu0
    %v728 = vxor.u32 %v705, 2147483648
    %v729 = vxor.u32 %v710, 2147483648
    %v730 = vxor.u32 %v715, 2147483648
    %v731 = vxor.u32 %v720, 2147483648
    %v732 = vxor.u32 %v725, 2147483648
    %v733 = vmul.f32 %v728, 1.442695
    %v734 = vpow.pop %v733
    %v735 = vmul.f32 %v729, 1.442695
    %v736 = vpow.pop %v735
    %v737 = vmul.f32 %v730, 1.442695
    %v738 = vpow.pop %v737
    %v739 = vmul.f32 %v731, 1.442695
    %v740 = vpow.pop %v739
    %v741 = vmul.f32 %v732, 1.442695
    %v742 = vpow.pop %v741
    %v743 = vadd.f32 %v734, 1.0
    %v744 = vadd.f32 %v736, 1.0
    %v745 = vadd.f32 %v738, 1.0
    %v746 = vadd.f32 %v740, 1.0
    %v747 = vadd.f32 %v742, 1.0
    %v748 = vrcp.pop %v743
    %v749 = vmul.f32 1.0, %v748
    %v750 = vrcp.pop %v744
    %v751 = vmul.f32 1.0, %v750
    %v752 = vrcp.pop %v745
    %v753 = vmul.f32 1.0, %v752
    %v754 = vrcp.pop %v746
    %v755 = vmul.f32 1.0, %v754
    %v756 = vrcp.pop %v747
    %v757 = vmul.f32 1.0, %v756
    %v758 = vmul.f32 %v705, %v749
    %v759 = vmul.f32 %v710, %v751
    %v760 = vmul.f32 %v715, %v753
    %v761 = vmul.f32 %v720, %v755
    %v762 = vmul.f32 %v725, %v757
    %v763 = vpack.c.bf16 %v630, %v629
    %764 = vmatprep.subr.bf16.mxu0 0
    %765 = vmatpush1.bf16.msra.mxu0 0
    %766 = vmatprep.subr.bf16.mxu0 0
    %767 = vmatpush1.bf16.msra.mxu0 0
    %768 = vmatprep.subr.bf16.mxu0 0
    %769 = vmatpush1.bf16.msra.mxu0 0
    %770 = vmatprep.subr.bf16.mxu0 0
    %771 = vmatpush1.bf16.msra.mxu0 0
    %772 = vmatprep.subr.bf16.mxu0 0
    %773 = vmatpush1.bf16.msra.mxu0 0
    %774 = vmatprep.subr.bf16.mxu0 0
    %775 = vmatpush1.bf16.msra.mxu0 0
    %776 = vmatprep.subr.bf16.mxu0 0
    %777 = vmatpush1.bf16.msra.mxu0 0
    %778 = vmatprep.subr.bf16.mxu0 0
    %779 = vmatpush1.bf16.msra.mxu0 %v763
    %780 = vmatprep.subr.bf16.mxu0 0
    %781 = vmatpush2.bf16.msra.mxu0 0
    %782 = vmatprep.subr.bf16.mxu0 0
    %783 = vmatpush2.bf16.msra.mxu0 0
    %784 = vmatprep.subr.bf16.mxu0 0
    %785 = vmatpush2.bf16.msra.mxu0 0
    %786 = vmatprep.subr.bf16.mxu0 0
    %787 = vmatpush2.bf16.msra.mxu0 0
    %788 = vmatprep.subr.bf16.mxu0 0
    %789 = vmatpush2.bf16.msra.mxu0 0
    %790 = vmatprep.subr.bf16.mxu0 0
    %791 = vmatpush2.bf16.msra.mxu0 0
    %792 = vmatprep.subr.bf16.mxu0 0
    %793 = vmatpush2.bf16.msra.mxu0 0
    %794 = vmatprep.subr.bf16.mxu0 0
    %795 = vmatpush2.bf16.msra.mxu0 0
    %796 = vmatprep.mubr.bf16.mxu0 0
    %797 = vmatmul.mubr.bf16.gmra.mxu0 %v377
    %v798 = vpop.f32.mrf.mxu0
    %v799 = vadd.f32 0.0, %v798
    %v800 = vpop.f32.mrf.mxu0
    %v801 = vpop.f32.mrf.mxu0
    %v802 = vadd.f32 0.0, %v801
    %v803 = vpop.f32.mrf.mxu0
    %804 = vmatprep.mubr.bf16.mxu0 0
    %805 = vmatmul.mubr.bf16.gmra.mxu0 %v380
    %v806 = vpop.f32.mrf.mxu0
    %v807 = vadd.f32 0.0, %v806
    %v808 = vpop.f32.mrf.mxu0
    %v809 = vpop.f32.mrf.mxu0
    %v810 = vadd.f32 0.0, %v809
    %v811 = vpop.f32.mrf.mxu0
    %812 = vmatprep.mubr.bf16.mxu0 0
    %813 = vmatmul.mubr.bf16.gmra.mxu0 %v383
    %v814 = vpop.f32.mrf.mxu0
    %v815 = vadd.f32 0.0, %v814
    %v816 = vpop.f32.mrf.mxu0
    %v817 = vpop.f32.mrf.mxu0
    %v818 = vpop.f32.mrf.mxu0
    %819 = vdwg.mxu0
    %v820 = vmul.f32 %v799, %v758
    %v821 = vmul.f32 %v802, %v759
    %v822 = vmul.f32 %v807, %v760
    %v823 = vmul.f32 %v810, %v761
    %v824 = vmul.f32 %v815, %v762
    %v825 = vpack.c.bf16 %v821, %v820
    %v826 = vpack.c.bf16 %v823, %v822
    %v827 = vpack.c.bf16 %v824, %v824
    %v829 = vsel %vm453, %v827, 0
    %831 = vmatprep.subr.bf16.mxu0 0
    %832 = vmatpush1.bf16.msra.mxu0 0
    %833 = vmatprep.subr.bf16.mxu0 0
    %834 = vmatpush1.bf16.msra.mxu0 0
    %835 = vmatprep.subr.bf16.mxu0 0
    %836 = vmatpush1.bf16.msra.mxu0 0
    %837 = vmatprep.subr.bf16.mxu0 0
    %838 = vmatpush1.bf16.msra.mxu0 0
    %839 = vmatprep.subr.bf16.mxu0 0
    %840 = vmatpush1.bf16.msra.mxu0 0
    %841 = vmatprep.subr.bf16.mxu0 0
    %842 = vmatpush1.bf16.msra.mxu0 %v829
    %843 = vmatprep.subr.bf16.mxu0 0
    %844 = vmatpush1.bf16.msra.mxu0 %v826
    %845 = vmatprep.subr.bf16.mxu0 0
    %846 = vmatpush1.bf16.msra.mxu0 %v825
    %847 = vmatprep.subr.bf16.mxu0 0
    %848 = vmatpush2.bf16.msra.mxu0 0
    %849 = vmatprep.subr.bf16.mxu0 0
    %850 = vmatpush2.bf16.msra.mxu0 0
    %851 = vmatprep.subr.bf16.mxu0 0
    %852 = vmatpush2.bf16.msra.mxu0 0
    %853 = vmatprep.subr.bf16.mxu0 0
    %854 = vmatpush2.bf16.msra.mxu0 0
    %855 = vmatprep.subr.bf16.mxu0 0
    %856 = vmatpush2.bf16.msra.mxu0 0
    %857 = vmatprep.subr.bf16.mxu0 0
    %858 = vmatpush2.bf16.msra.mxu0 0
    %859 = vmatprep.subr.bf16.mxu0 0
    %860 = vmatpush2.bf16.msra.mxu0 0
    %861 = vmatprep.subr.bf16.mxu0 0
    %862 = vmatpush2.bf16.msra.mxu0 0
    %863 = vmatprep.mubr.bf16.mxu0 0
    %864 = vmatmul.mubr.bf16.gmra.mxu0 %v451
    %v865 = vpop.f32.mrf.mxu0
    %v866 = vadd.f32 0.0, %v865
    %v867 = vpop.f32.mrf.mxu0
    %v868 = vpop.f32.mrf.mxu0
    %v869 = vadd.f32 0.0, %v868
    %v870 = vpop.f32.mrf.mxu0
    %871 = vdwg.mxu0
    %v872 = vadd.f32 %v629, %v866
    %v873 = vadd.f32 %v630, %v869
    %s874 = scalar_lea.vmem [#allocation2], 128
    %v875 = vld [vmem:[%s874] sm:$0xff]
    %v876 = vld [vmem:[%s874 + $0x8] sm:$0xff]
    %v877 = vld [vmem:[%s874 + $0x10] sm:$0xff]
    %v878 = vld [vmem:[%s874 + $0x18] sm:$0xff]
    %v879 = vld [vmem:[%s874 + $0x20] sm:$0xff]
    %v880 = vld [vmem:[%s874 + $0x28] sm:$0xff]
    %v881 = vld [vmem:[%s874 + $0x30] sm:$0xff]
    %v882 = vld [vmem:[%s874 + $0x38] sm:$0xff]
    %v883 = vld [vmem:[%s874 + $0x40] sm:$0xff]
    %v884 = vld [vmem:[%s874 + $0x48] sm:$0xff]
    %v885 = vld [vmem:[%s874 + $0x50] sm:$0xff]
    %v886 = vld [vmem:[%s874 + $0x58] sm:$0xff]
    %v887 = vld [vmem:[%s874 + $0x60] sm:$0xff]
    %v888 = vld [vmem:[%s874 + $0x68] sm:$0xff]
    %v889 = vld [vmem:[%s874 + $0x70] sm:$0xff]
    %v890 = vld [vmem:[%s874 + $0x78] sm:$0xff]
    %s891 = scalar_lea.vmem %s9, 2
    %v892 = vld [vmem:[%s891] sm:$0x1]
    %v894 = vlaneseq
    %v895 = vshrl.u32 %v894, 7
    %v896 = vsub.s32 0, %v895
    %v897 = vrot.slane %v892, %v896
    %899 = vmatprep.subr.mxu0 0.0
    %900 = vmatpush1.msra.mxu0 %v890
    %901 = vmatprep.subr.mxu0 0.0
    %902 = vmatpush1.msra.mxu0 %v889
    %903 = vmatprep.subr.mxu0 0.0
    %904 = vmatpush1.msra.mxu0 %v888
    %905 = vmatprep.subr.mxu0 0.0
    %906 = vmatpush1.msra.mxu0 %v887
    %907 = vmatprep.subr.mxu0 0.0
    %908 = vmatpush1.msra.mxu0 %v886
    %909 = vmatprep.subr.mxu0 0.0
    %910 = vmatpush1.msra.mxu0 %v885
    %911 = vmatprep.subr.mxu0 0.0
    %912 = vmatpush1.msra.mxu0 %v884
    %913 = vmatprep.subr.mxu0 0.0
    %914 = vmatpush1.msra.mxu0 %v883
    %915 = vmatprep.subr.mxu0 0.0
    %916 = vmatpush1.msra.mxu0 %v882
    %917 = vmatprep.subr.mxu0 0.0
    %918 = vmatpush1.msra.mxu0 %v881
    %919 = vmatprep.subr.mxu0 0.0
    %920 = vmatpush1.msra.mxu0 %v880
    %921 = vmatprep.subr.mxu0 0.0
    %922 = vmatpush1.msra.mxu0 %v879
    %923 = vmatprep.subr.mxu0 0.0
    %924 = vmatpush1.msra.mxu0 %v878
    %925 = vmatprep.subr.mxu0 0.0
    %926 = vmatpush1.msra.mxu0 %v877
    %927 = vmatprep.subr.mxu0 0.0
    %928 = vmatpush1.msra.mxu0 %v876
    %929 = vmatprep.subr.mxu0 0.0
    %930 = vmatpush1.msra.mxu0 %v875
    %931 = vmatprep.subr.mxu0 0.0
    %932 = vmatpush2.msra.mxu0 0.0
    %933 = vmatprep.subr.mxu0 0.0
    %934 = vmatpush2.msra.mxu0 0.0
    %935 = vmatprep.subr.mxu0 0.0
    %936 = vmatpush2.msra.mxu0 0.0
    %937 = vmatprep.subr.mxu0 0.0
    %938 = vmatpush2.msra.mxu0 0.0
    %939 = vmatprep.subr.mxu0 0.0
    %940 = vmatpush2.msra.mxu0 0.0
    %941 = vmatprep.subr.mxu0 0.0
    %942 = vmatpush2.msra.mxu0 0.0
    %943 = vmatprep.subr.mxu0 0.0
    %944 = vmatpush2.msra.mxu0 0.0
    %945 = vmatprep.subr.mxu0 0.0
    %946 = vmatpush2.msra.mxu0 0.0
    %947 = vmatprep.subr.mxu0 0.0
    %948 = vmatpush2.msra.mxu0 0.0
    %949 = vmatprep.subr.mxu0 0.0
    %950 = vmatpush2.msra.mxu0 0.0
    %951 = vmatprep.subr.mxu0 0.0
    %952 = vmatpush2.msra.mxu0 0.0
    %953 = vmatprep.subr.mxu0 0.0
    %954 = vmatpush2.msra.mxu0 0.0
    %955 = vmatprep.subr.mxu0 0.0
    %956 = vmatpush2.msra.mxu0 0.0
    %957 = vmatprep.subr.mxu0 0.0
    %958 = vmatpush2.msra.mxu0 0.0
    %959 = vmatprep.subr.mxu0 0.0
    %960 = vmatpush2.msra.mxu0 0.0
    %961 = vmatprep.subr.mxu0 0.0
    %962 = vmatpush2.msra.mxu0 0.0
    %963 = vmatprep.mubr.f32.mxu0 0.0
    %964 = vmatmul.mubr.f32.gmra.mxu0 %v872
    %v965 = vpop.f32.mrf.mxu0
    %v966 = vadd.f32 %v897, %v965
    %v967 = vpop.f32.mrf.mxu0
    %968 = vmatprep.mubr.f32.mxu0 0.0
    %969 = vmatmul.mubr.f32.gmra.mxu0 %v873
    %v970 = vpop.f32.mrf.mxu0
    %v971 = vadd.f32 %v897, %v970
    %v972 = vpop.f32.mrf.mxu0
    %973 = vdwg.mxu0
    %vm974 = vcmp.ge.f32.partialorder %v966, 0.0
    %vm975 = vcmp.ge.f32.partialorder %v971, 0.0
    %v976 = vmul.f32 %v966, 0.01
    %v977 = vmul.f32 %v971, 0.01
    %v978 = vsel %vm974, %v966, %v976
    %v979 = vsel %vm975, %v971, %v977
    %980 = vrot.lane.b32.xlu0 %v978, 32
    %v981 = vpop.permute.xlu0 %980
    %982 = vrot.lane.b32.xlu0 %v979, 32
    %v983 = vpop.permute.xlu0 %982
    %v984 = vadd.f32 %v978, %v981
    %v985 = vadd.f32 %v979, %v983
    %986 = vrot.lane.b32.xlu0 %v978, 96
    %v987 = vpop.permute.xlu0 %986
    %988 = vrot.lane.b32.xlu0 %v979, 96
    %v989 = vpop.permute.xlu0 %988
    %v990 = vadd.f32 %v984, %v987
    %v991 = vadd.f32 %v985, %v989
    %v992 = vmul.f32 %v990, %v114
    %v993 = vmul.f32 %v991, %v114
    %994 = vrot.lane.b32.xlu0 %v992, 32
    %v995 = vpop.permute.xlu0 %994
    %996 = vrot.lane.b32.xlu0 %v993, 32
    %v997 = vpop.permute.xlu0 %996
    %v998 = vadd.f32 %v992, %v995
    %v999 = vadd.f32 %v993, %v997
    %1000 = vrot.lane.b32.xlu0 %v992, 96
    %v1001 = vpop.permute.xlu0 %1000
    %1002 = vrot.lane.b32.xlu0 %v993, 96
    %v1003 = vpop.permute.xlu0 %1002
    %v1004 = vadd.f32 %v998, %v1001
    %v1005 = vadd.f32 %v999, %v1003
    %s1006 = scalar_lea.vmem %s6, 48
    %v1007 = vld [vmem:[%s1006] sm:$0xff]
    %v1008 = vld [vmem:[%s1006 + $0x8] sm:$0xff]
    %v1009 = vld [vmem:[%s1006 + $0x10] sm:$0xf]
    %v1011 = vsel %vm245, %v1009, 0
    %1013 = vmatprep.subr.mxu0 0.0
    %1014 = vmatpush1.msra.mxu0 0.0
    %1015 = vmatprep.subr.mxu0 0.0
    %1016 = vmatpush1.msra.mxu0 0.0
    %1017 = vmatprep.subr.mxu0 0.0
    %1018 = vmatpush1.msra.mxu0 0.0
    %1019 = vmatprep.subr.mxu0 0.0
    %1020 = vmatpush1.msra.mxu0 0.0
    %1021 = vmatprep.subr.mxu0 0.0
    %1022 = vmatpush1.msra.mxu0 0.0
    %1023 = vmatprep.subr.mxu0 0.0
    %1024 = vmatpush1.msra.mxu0 0.0
    %1025 = vmatprep.subr.mxu0 0.0
    %1026 = vmatpush1.msra.mxu0 0.0
    %1027 = vmatprep.subr.mxu0 0.0
    %1028 = vmatpush1.msra.mxu0 0.0
    %1029 = vmatprep.subr.mxu0 0.0
    %1030 = vmatpush1.msra.mxu0 0.0
    %1031 = vmatprep.subr.mxu0 0.0
    %1032 = vmatpush1.msra.mxu0 0.0
    %1033 = vmatprep.subr.mxu0 0.0
    %1034 = vmatpush1.msra.mxu0 0.0
    %1035 = vmatprep.subr.mxu0 0.0
    %1036 = vmatpush1.msra.mxu0 0.0
    %1037 = vmatprep.subr.mxu0 0.0
    %1038 = vmatpush1.msra.mxu0 0.0
    %1039 = vmatprep.subr.mxu0 0.0
    %1040 = vmatpush1.msra.mxu0 %v1011
    %1041 = vmatprep.subr.mxu0 0.0
    %1042 = vmatpush1.msra.mxu0 %v1008
    %1043 = vmatprep.subr.mxu0 0.0
    %1044 = vmatpush1.msra.mxu0 %v1007
    %1045 = vmatprep.subr.mxu0 0.0
    %1046 = vmatpush2.msra.mxu0 0.0
    %1047 = vmatprep.subr.mxu0 0.0
    %1048 = vmatpush2.msra.mxu0 0.0
    %1049 = vmatprep.subr.mxu0 0.0
    %1050 = vmatpush2.msra.mxu0 0.0
    %1051 = vmatprep.subr.mxu0 0.0
    %1052 = vmatpush2.msra.mxu0 0.0
    %1053 = vmatprep.subr.mxu0 0.0
    %1054 = vmatpush2.msra.mxu0 0.0
    %1055 = vmatprep.subr.mxu0 0.0
    %1056 = vmatpush2.msra.mxu0 0.0
    %1057 = vmatprep.subr.mxu0 0.0
    %1058 = vmatpush2.msra.mxu0 0.0
    %1059 = vmatprep.subr.mxu0 0.0
    %1060 = vmatpush2.msra.mxu0 0.0
    %1061 = vmatprep.subr.mxu0 0.0
    %1062 = vmatpush2.msra.mxu0 0.0
    %1063 = vmatprep.subr.mxu0 0.0
    %1064 = vmatpush2.msra.mxu0 0.0
    %1065 = vmatprep.subr.mxu0 0.0
    %1066 = vmatpush2.msra.mxu0 0.0
    %1067 = vmatprep.subr.mxu0 0.0
    %1068 = vmatpush2.msra.mxu0 0.0
    %1069 = vmatprep.subr.mxu0 0.0
    %1070 = vmatpush2.msra.mxu0 0.0
    %1071 = vmatprep.subr.mxu0 0.0
    %1072 = vmatpush2.msra.mxu0 0.0
    %1073 = vmatprep.subr.mxu0 0.0
    %1074 = vmatpush2.msra.mxu0 0.0
    %1075 = vmatprep.subr.mxu0 0.0
    %1076 = vmatpush2.msra.mxu0 0.0
    %1077 = vmatprep.mubr.f32.mxu0 0.0
    %1078 = vmatmul.mubr.f32.gmra.mxu0 %v231
    %v1079 = vpop.f32.mrf.mxu0
    %v1080 = vadd.f32 0.0, %v1079
    %v1081 = vpop.f32.mrf.mxu0
    %1082 = vmatprep.mubr.f32.mxu0 0.0
    %1083 = vmatmul.mubr.f32.gmra.mxu0 %v234
    %v1084 = vpop.f32.mrf.mxu0
    %v1085 = vadd.f32 0.0, %v1084
    %v1086 = vpop.f32.mrf.mxu0
    %1087 = vmatprep.mubr.f32.mxu0 0.0
    %1088 = vmatmul.mubr.f32.gmra.mxu0 %v237
    %v1089 = vpop.f32.mrf.mxu0
    %v1090 = vadd.f32 0.0, %v1089
    %v1091 = vpop.f32.mrf.mxu0
    %1092 = vmatprep.mubr.f32.mxu0 0.0
    %1093 = vmatmul.mubr.f32.gmra.mxu0 %v240
    %v1094 = vpop.f32.mrf.mxu0
    %v1095 = vadd.f32 0.0, %v1094
    %v1096 = vpop.f32.mrf.mxu0
    %1097 = vmatprep.mubr.f32.mxu0 0.0
    %1098 = vmatmul.mubr.f32.gmra.mxu0 %v243
    %v1099 = vpop.f32.mrf.mxu0
    %v1100 = vadd.f32 0.0, %v1099
    %v1101 = vpop.f32.mrf.mxu0
    %1102 = vdwg.mxu0
    %v1103 = vxor.u32 %v1080, 2147483648
    %v1104 = vxor.u32 %v1085, 2147483648
    %v1105 = vxor.u32 %v1090, 2147483648
    %v1106 = vxor.u32 %v1095, 2147483648
    %v1107 = vxor.u32 %v1100, 2147483648
    %v1108 = vmul.f32 %v1103, 1.442695
    %v1109 = vpow.pop %v1108
    %v1110 = vmul.f32 %v1104, 1.442695
    %v1111 = vpow.pop %v1110
    %v1112 = vmul.f32 %v1105, 1.442695
    %v1113 = vpow.pop %v1112
    %v1114 = vmul.f32 %v1106, 1.442695
    %v1115 = vpow.pop %v1114
    %v1116 = vmul.f32 %v1107, 1.442695
    %v1117 = vpow.pop %v1116
    %v1118 = vadd.f32 %v1109, 1.0
    %v1119 = vadd.f32 %v1111, 1.0
    %v1120 = vadd.f32 %v1113, 1.0
    %v1121 = vadd.f32 %v1115, 1.0
    %v1122 = vadd.f32 %v1117, 1.0
    %v1123 = vrcp.pop %v1118
    %v1124 = vmul.f32 1.0, %v1123
    %v1125 = vrcp.pop %v1119
    %v1126 = vmul.f32 1.0, %v1125
    %v1127 = vrcp.pop %v1120
    %v1128 = vmul.f32 1.0, %v1127
    %v1129 = vrcp.pop %v1121
    %v1130 = vmul.f32 1.0, %v1129
    %v1131 = vrcp.pop %v1122
    %v1132 = vmul.f32 1.0, %v1131
    %v1133 = vmul.f32 %v1080, %v1124
    %v1134 = vmul.f32 %v1085, %v1126
    %v1135 = vmul.f32 %v1090, %v1128
    %v1136 = vmul.f32 %v1095, %v1130
    %v1137 = vmul.f32 %v1100, %v1132
    %v1138 = vpack.c.bf16 %v1005, %v1004
    %1139 = vmatprep.subr.bf16.mxu0 0
    %1140 = vmatpush1.bf16.msra.mxu0 0
    %1141 = vmatprep.subr.bf16.mxu0 0
    %1142 = vmatpush1.bf16.msra.mxu0 0
    %1143 = vmatprep.subr.bf16.mxu0 0
    %1144 = vmatpush1.bf16.msra.mxu0 0
    %1145 = vmatprep.subr.bf16.mxu0 0
    %1146 = vmatpush1.bf16.msra.mxu0 0
    %1147 = vmatprep.subr.bf16.mxu0 0
    %1148 = vmatpush1.bf16.msra.mxu0 0
    %1149 = vmatprep.subr.bf16.mxu0 0
    %1150 = vmatpush1.bf16.msra.mxu0 0
    %1151 = vmatprep.subr.bf16.mxu0 0
    %1152 = vmatpush1.bf16.msra.mxu0 0
    %1153 = vmatprep.subr.bf16.mxu0 0
    %1154 = vmatpush1.bf16.msra.mxu0 %v1138
    %1155 = vmatprep.subr.bf16.mxu0 0
    %1156 = vmatpush2.bf16.msra.mxu0 0
    %1157 = vmatprep.subr.bf16.mxu0 0
    %1158 = vmatpush2.bf16.msra.mxu0 0
    %1159 = vmatprep.subr.bf16.mxu0 0
    %1160 = vmatpush2.bf16.msra.mxu0 0
    %1161 = vmatprep.subr.bf16.mxu0 0
    %1162 = vmatpush2.bf16.msra.mxu0 0
    %1163 = vmatprep.subr.bf16.mxu0 0
    %1164 = vmatpush2.bf16.msra.mxu0 0
    %1165 = vmatprep.subr.bf16.mxu0 0
    %1166 = vmatpush2.bf16.msra.mxu0 0
    %1167 = vmatprep.subr.bf16.mxu0 0
    %1168 = vmatpush2.bf16.msra.mxu0 0
    %1169 = vmatprep.subr.bf16.mxu0 0
    %1170 = vmatpush2.bf16.msra.mxu0 0
    %1171 = vmatprep.mubr.bf16.mxu0 0
    %1172 = vmatmul.mubr.bf16.gmra.mxu0 %v377
    %v1173 = vpop.f32.mrf.mxu0
    %v1174 = vadd.f32 0.0, %v1173
    %v1175 = vpop.f32.mrf.mxu0
    %v1176 = vpop.f32.mrf.mxu0
    %v1177 = vadd.f32 0.0, %v1176
    %v1178 = vpop.f32.mrf.mxu0
    %1179 = vmatprep.mubr.bf16.mxu0 0
    %1180 = vmatmul.mubr.bf16.gmra.mxu0 %v380
    %v1181 = vpop.f32.mrf.mxu0
    %v1182 = vadd.f32 0.0, %v1181
    %v1183 = vpop.f32.mrf.mxu0
    %v1184 = vpop.f32.mrf.mxu0
    %v1185 = vadd.f32 0.0, %v1184
    %v1186 = vpop.f32.mrf.mxu0
    %1187 = vmatprep.mubr.bf16.mxu0 0
    %1188 = vmatmul.mubr.bf16.gmra.mxu0 %v383
    %v1189 = vpop.f32.mrf.mxu0
    %v1190 = vadd.f32 0.0, %v1189
    %v1191 = vpop.f32.mrf.mxu0
    %v1192 = vpop.f32.mrf.mxu0
    %v1193 = vpop.f32.mrf.mxu0
    %1194 = vdwg.mxu0
    %v1195 = vmul.f32 %v1174, %v1133
    %v1196 = vmul.f32 %v1177, %v1134
    %v1197 = vmul.f32 %v1182, %v1135
    %v1198 = vmul.f32 %v1185, %v1136
    %v1199 = vmul.f32 %v1190, %v1137
    %v1200 = vpack.c.bf16 %v1196, %v1195
    %v1201 = vpack.c.bf16 %v1198, %v1197
    %v1202 = vpack.c.bf16 %v1199, %v1199
    %v1204 = vsel %vm453, %v1202, 0
    %1206 = vmatprep.subr.bf16.mxu0 0
    %1207 = vmatpush1.bf16.msra.mxu0 0
    %1208 = vmatprep.subr.bf16.mxu0 0
    %1209 = vmatpush1.bf16.msra.mxu0 0
    %1210 = vmatprep.subr.bf16.mxu0 0
    %1211 = vmatpush1.bf16.msra.mxu0 0
    %1212 = vmatprep.subr.bf16.mxu0 0
    %1213 = vmatpush1.bf16.msra.mxu0 0
    %1214 = vmatprep.subr.bf16.mxu0 0
    %1215 = vmatpush1.bf16.msra.mxu0 0
    %1216 = vmatprep.subr.bf16.mxu0 0
    %1217 = vmatpush1.bf16.msra.mxu0 %v1204
    %1218 = vmatprep.subr.bf16.mxu0 0
    %1219 = vmatpush1.bf16.msra.mxu0 %v1201
    %1220 = vmatprep.subr.bf16.mxu0 0
    %1221 = vmatpush1.bf16.msra.mxu0 %v1200
    %1222 = vmatprep.subr.bf16.mxu0 0
    %1223 = vmatpush2.bf16.msra.mxu0 0
    %1224 = vmatprep.subr.bf16.mxu0 0
    %1225 = vmatpush2.bf16.msra.mxu0 0
    %1226 = vmatprep.subr.bf16.mxu0 0
    %1227 = vmatpush2.bf16.msra.mxu0 0
    %1228 = vmatprep.subr.bf16.mxu0 0
    %1229 = vmatpush2.bf16.msra.mxu0 0
    %1230 = vmatprep.subr.bf16.mxu0 0
    %1231 = vmatpush2.bf16.msra.mxu0 0
    %1232 = vmatprep.subr.bf16.mxu0 0
    %1233 = vmatpush2.bf16.msra.mxu0 0
    %1234 = vmatprep.subr.bf16.mxu0 0
    %1235 = vmatpush2.bf16.msra.mxu0 0
    %1236 = vmatprep.subr.bf16.mxu0 0
    %1237 = vmatpush2.bf16.msra.mxu0 0
    %1238 = vmatprep.mubr.bf16.mxu0 0
    %1239 = vmatmul.mubr.bf16.gmra.mxu0 %v451
    %v1240 = vpop.f32.mrf.mxu0
    %v1241 = vadd.f32 0.0, %v1240
    %v1242 = vpop.f32.mrf.mxu0
    %v1243 = vpop.f32.mrf.mxu0
    %v1244 = vadd.f32 0.0, %v1243
    %v1245 = vpop.f32.mrf.mxu0
    %1246 = vdwg.mxu0
    %v1247 = vadd.f32 %v1004, %v1241
    %v1248 = vadd.f32 %v1005, %v1244
    %s1249 = scalar_lea.vmem [#allocation2], 256
    %v1250 = vld [vmem:[%s1249] sm:$0xff]
    %v1251 = vld [vmem:[%s1249 + $0x8] sm:$0xff]
    %v1252 = vld [vmem:[%s1249 + $0x10] sm:$0xff]
    %v1253 = vld [vmem:[%s1249 + $0x18] sm:$0xff]
    %v1254 = vld [vmem:[%s1249 + $0x20] sm:$0xff]
    %v1255 = vld [vmem:[%s1249 + $0x28] sm:$0xff]
    %v1256 = vld [vmem:[%s1249 + $0x30] sm:$0xff]
    %v1257 = vld [vmem:[%s1249 + $0x38] sm:$0xff]
    %v1258 = vld [vmem:[%s1249 + $0x40] sm:$0xff]
    %v1259 = vld [vmem:[%s1249 + $0x48] sm:$0xff]
    %v1260 = vld [vmem:[%s1249 + $0x50] sm:$0xff]
    %v1261 = vld [vmem:[%s1249 + $0x58] sm:$0xff]
    %v1262 = vld [vmem:[%s1249 + $0x60] sm:$0xff]
    %v1263 = vld [vmem:[%s1249 + $0x68] sm:$0xff]
    %v1264 = vld [vmem:[%s1249 + $0x70] sm:$0xff]
    %v1265 = vld [vmem:[%s1249 + $0x78] sm:$0xff]
    %s1266 = scalar_lea.vmem %s9, 3
    %v1267 = vld [vmem:[%s1266] sm:$0x1]
    %v1269 = vlaneseq
    %v1270 = vshrl.u32 %v1269, 7
    %v1271 = vsub.s32 0, %v1270
    %v1272 = vrot.slane %v1267, %v1271
    %1274 = vmatprep.subr.mxu0 0.0
    %1275 = vmatpush1.msra.mxu0 %v1265
    %1276 = vmatprep.subr.mxu0 0.0
    %1277 = vmatpush1.msra.mxu0 %v1264
    %1278 = vmatprep.subr.mxu0 0.0
    %1279 = vmatpush1.msra.mxu0 %v1263
    %1280 = vmatprep.subr.mxu0 0.0
    %1281 = vmatpush1.msra.mxu0 %v1262
    %1282 = vmatprep.subr.mxu0 0.0
    %1283 = vmatpush1.msra.mxu0 %v1261
    %1284 = vmatprep.subr.mxu0 0.0
    %1285 = vmatpush1.msra.mxu0 %v1260
    %1286 = vmatprep.subr.mxu0 0.0
    %1287 = vmatpush1.msra.mxu0 %v1259
    %1288 = vmatprep.subr.mxu0 0.0
    %1289 = vmatpush1.msra.mxu0 %v1258
    %1290 = vmatprep.subr.mxu0 0.0
    %1291 = vmatpush1.msra.mxu0 %v1257
    %1292 = vmatprep.subr.mxu0 0.0
    %1293 = vmatpush1.msra.mxu0 %v1256
    %1294 = vmatprep.subr.mxu0 0.0
    %1295 = vmatpush1.msra.mxu0 %v1255
    %1296 = vmatprep.subr.mxu0 0.0
    %1297 = vmatpush1.msra.mxu0 %v1254
    %1298 = vmatprep.subr.mxu0 0.0
    %1299 = vmatpush1.msra.mxu0 %v1253
    %1300 = vmatprep.subr.mxu0 0.0
    %1301 = vmatpush1.msra.mxu0 %v1252
    %1302 = vmatprep.subr.mxu0 0.0
    %1303 = vmatpush1.msra.mxu0 %v1251
    %1304 = vmatprep.subr.mxu0 0.0
    %1305 = vmatpush1.msra.mxu0 %v1250
    %1306 = vmatprep.subr.mxu0 0.0
    %1307 = vmatpush2.msra.mxu0 0.0
    %1308 = vmatprep.subr.mxu0 0.0
    %1309 = vmatpush2.msra.mxu0 0.0
    %1310 = vmatprep.subr.mxu0 0.0
    %1311 = vmatpush2.msra.mxu0 0.0
    %1312 = vmatprep.subr.mxu0 0.0
    %1313 = vmatpush2.msra.mxu0 0.0
    %1314 = vmatprep.subr.mxu0 0.0
    %1315 = vmatpush2.msra.mxu0 0.0
    %1316 = vmatprep.subr.mxu0 0.0
    %1317 = vmatpush2.msra.mxu0 0.0
    %1318 = vmatprep.subr.mxu0 0.0
    %1319 = vmatpush2.msra.mxu0 0.0
    %1320 = vmatprep.subr.mxu0 0.0
    %1321 = vmatpush2.msra.mxu0 0.0
    %1322 = vmatprep.subr.mxu0 0.0
    %1323 = vmatpush2.msra.mxu0 0.0
    %1324 = vmatprep.subr.mxu0 0.0
    %1325 = vmatpush2.msra.mxu0 0.0
    %1326 = vmatprep.subr.mxu0 0.0
    %1327 = vmatpush2.msra.mxu0 0.0
    %1328 = vmatprep.subr.mxu0 0.0
    %1329 = vmatpush2.msra.mxu0 0.0
    %1330 = vmatprep.subr.mxu0 0.0
    %1331 = vmatpush2.msra.mxu0 0.0
    %1332 = vmatprep.subr.mxu0 0.0
    %1333 = vmatpush2.msra.mxu0 0.0
    %1334 = vmatprep.subr.mxu0 0.0
    %1335 = vmatpush2.msra.mxu0 0.0
    %1336 = vmatprep.subr.mxu0 0.0
    %1337 = vmatpush2.msra.mxu0 0.0
    %1338 = vmatprep.mubr.f32.mxu0 0.0
    %1339 = vmatmul.mubr.f32.gmra.mxu0 %v1247
    %v1340 = vpop.f32.mrf.mxu0
    %v1341 = vadd.f32 %v1272, %v1340
    %v1342 = vpop.f32.mrf.mxu0
    %1343 = vmatprep.mubr.f32.mxu0 0.0
    %1344 = vmatmul.mubr.f32.gmra.mxu0 %v1248
    %v1345 = vpop.f32.mrf.mxu0
    %v1346 = vadd.f32 %v1272, %v1345
    %v1347 = vpop.f32.mrf.mxu0
    %1348 = vdwg.mxu0
    %vm1349 = vcmp.ge.f32.partialorder %v1341, 0.0
    %vm1350 = vcmp.ge.f32.partialorder %v1346, 0.0
    %v1351 = vmul.f32 %v1341, 0.01
    %v1352 = vmul.f32 %v1346, 0.01
    %v1353 = vsel %vm1349, %v1341, %v1351
    %v1354 = vsel %vm1350, %v1346, %v1352
    %1355 = vrot.lane.b32.xlu0 %v1353, 32
    %v1356 = vpop.permute.xlu0 %1355
    %1357 = vrot.lane.b32.xlu0 %v1354, 32
    %v1358 = vpop.permute.xlu0 %1357
    %v1359 = vadd.f32 %v1353, %v1356
    %v1360 = vadd.f32 %v1354, %v1358
    %1361 = vrot.lane.b32.xlu0 %v1353, 96
    %v1362 = vpop.permute.xlu0 %1361
    %1363 = vrot.lane.b32.xlu0 %v1354, 96
    %v1364 = vpop.permute.xlu0 %1363
    %v1365 = vadd.f32 %v1359, %v1362
    %v1366 = vadd.f32 %v1360, %v1364
    %v1367 = vmul.f32 %v1365, %v114
    %v1368 = vmul.f32 %v1366, %v114
    %v1369 = vld [vmem:[%s4] sm:$0x1]
    %v1370 = vlaneseq
    %v1371 = vshrl.u32 %v1370, 7
    %v1372 = vsub.s32 0, %v1371
    %v1373 = vrot.slane %v1369, %v1372
    %vm1374 = vcmp.eq.s32.totalorder %v101, %v1373
    %v1375 = vsel %vm1374, 1.0, 0.0
    %v1376 = vpack.c.bf16 %v1375, %v1375
    %v1377 = vpack.c.bf16 %v1368, %v1367
    %v1379 = vsel %vm375, %v1376, 0
    %1381 = vmatprep.subr.bf16.mxu0 0
    %1382 = vmatpush1.bf16.msra.mxu0 0
    %1383 = vmatprep.subr.bf16.mxu0 0
    %1384 = vmatpush1.bf16.msra.mxu0 0
    %1385 = vmatprep.subr.bf16.mxu0 0
    %1386 = vmatpush1.bf16.msra.mxu0 0
    %1387 = vmatprep.subr.bf16.mxu0 0
    %1388 = vmatpush1.bf16.msra.mxu0 0
    %1389 = vmatprep.subr.bf16.mxu0 0
    %1390 = vmatpush1.bf16.msra.mxu0 0
    %1391 = vmatprep.subr.bf16.mxu0 0
    %1392 = vmatpush1.bf16.msra.mxu0 0
    %1393 = vmatprep.subr.bf16.mxu0 0
    %1394 = vmatpush1.bf16.msra.mxu0 0
    %1395 = vmatprep.subr.bf16.mxu0 0
    %1396 = vmatpush1.bf16.msra.mxu0 %v1377
    %1397 = vmatprep.subr.bf16.mxu0 0
    %1398 = vmatpush2.bf16.msra.mxu0 0
    %1399 = vmatprep.subr.bf16.mxu0 0
    %1400 = vmatpush2.bf16.msra.mxu0 0
    %1401 = vmatprep.subr.bf16.mxu0 0
    %1402 = vmatpush2.bf16.msra.mxu0 0
    %1403 = vmatprep.subr.bf16.mxu0 0
    %1404 = vmatpush2.bf16.msra.mxu0 0
    %1405 = vmatprep.subr.bf16.mxu0 0
    %1406 = vmatpush2.bf16.msra.mxu0 0
    %1407 = vmatprep.subr.bf16.mxu0 0
    %1408 = vmatpush2.bf16.msra.mxu0 0
    %1409 = vmatprep.subr.bf16.mxu0 0
    %1410 = vmatpush2.bf16.msra.mxu0 0
    %1411 = vmatprep.subr.bf16.mxu0 0
    %1412 = vmatpush2.bf16.msra.mxu0 0
    %1413 = vmatprep.mubr.bf16.mxu0 0
    %1414 = vmatmul.mubr.bf16.gmra.mxu0 %v1379
    %v1415 = vpop.f32.mrf.mxu0
    %v1416 = vadd.f32 0.0, %v1415
    %v1417 = vpop.f32.mrf.mxu0
    %v1418 = vpop.f32.mrf.mxu0
    %v1419 = vpop.f32.mrf.mxu0
    %1420 = vdwg.mxu0
    %v1421 = vld [vmem:[#allocation5] sm:$0xff]
    %v1422 = vld [vmem:[#allocation5 + $0x8] sm:$0xff]
    %v1423 = vld [vmem:[#allocation5 + $0x10] sm:$0xff]
    %v1424 = vld [vmem:[#allocation5 + $0x18] sm:$0xff]
    %v1425 = vld [vmem:[#allocation5 + $0x20] sm:$0xff]
    %v1426 = vld [vmem:[#allocation5 + $0x28] sm:$0xff]
    %v1427 = vld [vmem:[#allocation5 + $0x30] sm:$0xff]
    %v1428 = vld [vmem:[#allocation5 + $0x38] sm:$0xff]
    %v1429 = vld [vmem:[#allocation5 + $0x40] sm:$0xff]
    %v1430 = vld [vmem:[#allocation5 + $0x48] sm:$0xff]
    %v1431 = vld [vmem:[#allocation5 + $0x50] sm:$0xff]
    %v1432 = vld [vmem:[#allocation5 + $0x58] sm:$0xff]
    %v1433 = vld [vmem:[#allocation5 + $0x60] sm:$0xff]
    %v1434 = vld [vmem:[#allocation5 + $0x68] sm:$0xff]
    %v1435 = vld [vmem:[#allocation5 + $0x70] sm:$0xff]
    %v1436 = vld [vmem:[#allocation5 + $0x78] sm:$0xff]
    %s1437 = scalar_lea.vmem %s9, 4
    %v1438 = vld [vmem:[%s1437] sm:$0x1]
    %v1440 = vlaneseq
    %v1441 = vshrl.u32 %v1440, 7
    %v1442 = vsub.s32 0, %v1441
    %v1443 = vrot.slane %v1438, %v1442
    %1445 = vmatprep.subr.mxu0 0.0
    %1446 = vmatpush1.msra.mxu0 %v1436
    %1447 = vmatprep.subr.mxu0 0.0
    %1448 = vmatpush1.msra.mxu0 %v1435
    %1449 = vmatprep.subr.mxu0 0.0
    %1450 = vmatpush1.msra.mxu0 %v1434
    %1451 = vmatprep.subr.mxu0 0.0
    %1452 = vmatpush1.msra.mxu0 %v1433
    %1453 = vmatprep.subr.mxu0 0.0
    %1454 = vmatpush1.msra.mxu0 %v1432
    %1455 = vmatprep.subr.mxu0 0.0
    %1456 = vmatpush1.msra.mxu0 %v1431
    %1457 = vmatprep.subr.mxu0 0.0
    %1458 = vmatpush1.msra.mxu0 %v1430
    %1459 = vmatprep.subr.mxu0 0.0
    %1460 = vmatpush1.msra.mxu0 %v1429
    %1461 = vmatprep.subr.mxu0 0.0
    %1462 = vmatpush1.msra.mxu0 %v1428
    %1463 = vmatprep.subr.mxu0 0.0
    %1464 = vmatpush1.msra.mxu0 %v1427
    %1465 = vmatprep.subr.mxu0 0.0
    %1466 = vmatpush1.msra.mxu0 %v1426
    %1467 = vmatprep.subr.mxu0 0.0
    %1468 = vmatpush1.msra.mxu0 %v1425
    %1469 = vmatprep.subr.mxu0 0.0
    %1470 = vmatpush1.msra.mxu0 %v1424
    %1471 = vmatprep.subr.mxu0 0.0
    %1472 = vmatpush1.msra.mxu0 %v1423
    %1473 = vmatprep.subr.mxu0 0.0
    %1474 = vmatpush1.msra.mxu0 %v1422
    %1475 = vmatprep.subr.mxu0 0.0
    %1476 = vmatpush1.msra.mxu0 %v1421
    %1477 = vmatprep.subr.mxu0 0.0
    %1478 = vmatpush2.msra.mxu0 0.0
    %1479 = vmatprep.subr.mxu0 0.0
    %1480 = vmatpush2.msra.mxu0 0.0
    %1481 = vmatprep.subr.mxu0 0.0
    %1482 = vmatpush2.msra.mxu0 0.0
    %1483 = vmatprep.subr.mxu0 0.0
    %1484 = vmatpush2.msra.mxu0 0.0
    %1485 = vmatprep.subr.mxu0 0.0
    %1486 = vmatpush2.msra.mxu0 0.0
    %1487 = vmatprep.subr.mxu0 0.0
    %1488 = vmatpush2.msra.mxu0 0.0
    %1489 = vmatprep.subr.mxu0 0.0
    %1490 = vmatpush2.msra.mxu0 0.0
    %1491 = vmatprep.subr.mxu0 0.0
    %1492 = vmatpush2.msra.mxu0 0.0
    %1493 = vmatprep.subr.mxu0 0.0
    %1494 = vmatpush2.msra.mxu0 0.0
    %1495 = vmatprep.subr.mxu0 0.0
    %1496 = vmatpush2.msra.mxu0 0.0
    %1497 = vmatprep.subr.mxu0 0.0
    %1498 = vmatpush2.msra.mxu0 0.0
    %1499 = vmatprep.subr.mxu0 0.0
    %1500 = vmatpush2.msra.mxu0 0.0
    %1501 = vmatprep.subr.mxu0 0.0
    %1502 = vmatpush2.msra.mxu0 0.0
    %1503 = vmatprep.subr.mxu0 0.0
    %1504 = vmatpush2.msra.mxu0 0.0
    %1505 = vmatprep.subr.mxu0 0.0
    %1506 = vmatpush2.msra.mxu0 0.0
    %1507 = vmatprep.subr.mxu0 0.0
    %1508 = vmatpush2.msra.mxu0 0.0
    %1509 = vmatprep.mubr.f32.mxu0 0.0
    %1510 = vmatmul.mubr.f32.gmra.mxu0 %v1416
    %v1511 = vpop.f32.mrf.mxu0
    %v1512 = vadd.f32 %v1443, %v1511
    %v1513 = vpop.f32.mrf.mxu0
    %1514 = vdwg.mxu0
    %vm1515 = vcmp.ge.f32.partialorder %v1512, 0.0
    %v1516 = vmul.f32 %v1512, 0.01
    %v1517 = vsel %vm1515, %v1512, %v1516
    %s1518 = scalar_lea.vmem [#allocation5], 128
    %v1519 = vld [vmem:[%s1518] sm:$0xff]
    %v1520 = vld [vmem:[%s1518 + $0x8] sm:$0xff]
    %v1521 = vld [vmem:[%s1518 + $0x10] sm:$0xff]
    %v1522 = vld [vmem:[%s1518 + $0x18] sm:$0xff]
    %v1523 = vld [vmem:[%s1518 + $0x20] sm:$0xff]
    %v1524 = vld [vmem:[%s1518 + $0x28] sm:$0xff]
    %v1525 = vld [vmem:[%s1518 + $0x30] sm:$0xff]
    %v1526 = vld [vmem:[%s1518 + $0x38] sm:$0xff]
    %v1527 = vld [vmem:[%s1518 + $0x40] sm:$0xff]
    %v1528 = vld [vmem:[%s1518 + $0x48] sm:$0xff]
    %v1529 = vld [vmem:[%s1518 + $0x50] sm:$0xff]
    %v1530 = vld [vmem:[%s1518 + $0x58] sm:$0xff]
    %v1531 = vld [vmem:[%s1518 + $0x60] sm:$0xff]
    %v1532 = vld [vmem:[%s1518 + $0x68] sm:$0xff]
    %v1533 = vld [vmem:[%s1518 + $0x70] sm:$0xff]
    %v1534 = vld [vmem:[%s1518 + $0x78] sm:$0xff]
    %s1535 = scalar_lea.vmem %s9, 5
    %v1536 = vld [vmem:[%s1535] sm:$0x1]
    %v1538 = vlaneseq
    %v1539 = vshrl.u32 %v1538, 7
    %v1540 = vsub.s32 0, %v1539
    %v1541 = vrot.slane %v1536, %v1540
    %1543 = vmatprep.subr.mxu0 0.0
    %1544 = vmatpush1.msra.mxu0 %v1534
    %1545 = vmatprep.subr.mxu0 0.0
    %1546 = vmatpush1.msra.mxu0 %v1533
    %1547 = vmatprep.subr.mxu0 0.0
    %1548 = vmatpush1.msra.mxu0 %v1532
    %1549 = vmatprep.subr.mxu0 0.0
    %1550 = vmatpush1.msra.mxu0 %v1531
    %1551 = vmatprep.subr.mxu0 0.0
    %1552 = vmatpush1.msra.mxu0 %v1530
    %1553 = vmatprep.subr.mxu0 0.0
    %1554 = vmatpush1.msra.mxu0 %v1529
    %1555 = vmatprep.subr.mxu0 0.0
    %1556 = vmatpush1.msra.mxu0 %v1528
    %1557 = vmatprep.subr.mxu0 0.0
    %1558 = vmatpush1.msra.mxu0 %v1527
    %1559 = vmatprep.subr.mxu0 0.0
    %1560 = vmatpush1.msra.mxu0 %v1526
    %1561 = vmatprep.subr.mxu0 0.0
    %1562 = vmatpush1.msra.mxu0 %v1525
    %1563 = vmatprep.subr.mxu0 0.0
    %1564 = vmatpush1.msra.mxu0 %v1524
    %1565 = vmatprep.subr.mxu0 0.0
    %1566 = vmatpush1.msra.mxu0 %v1523
    %1567 = vmatprep.subr.mxu0 0.0
    %1568 = vmatpush1.msra.mxu0 %v1522
    %1569 = vmatprep.subr.mxu0 0.0
    %1570 = vmatpush1.msra.mxu0 %v1521
    %1571 = vmatprep.subr.mxu0 0.0
    %1572 = vmatpush1.msra.mxu0 %v1520
    %1573 = vmatprep.subr.mxu0 0.0
    %1574 = vmatpush1.msra.mxu0 %v1519
    %1575 = vmatprep.subr.mxu0 0.0
    %1576 = vmatpush2.msra.mxu0 0.0
    %1577 = vmatprep.subr.mxu0 0.0
    %1578 = vmatpush2.msra.mxu0 0.0
    %1579 = vmatprep.subr.mxu0 0.0
    %1580 = vmatpush2.msra.mxu0 0.0
    %1581 = vmatprep.subr.mxu0 0.0
    %1582 = vmatpush2.msra.mxu0 0.0
    %1583 = vmatprep.subr.mxu0 0.0
    %1584 = vmatpush2.msra.mxu0 0.0
    %1585 = vmatprep.subr.mxu0 0.0
    %1586 = vmatpush2.msra.mxu0 0.0
    %1587 = vmatprep.subr.mxu0 0.0
    %1588 = vmatpush2.msra.mxu0 0.0
    %1589 = vmatprep.subr.mxu0 0.0
    %1590 = vmatpush2.msra.mxu0 0.0
    %1591 = vmatprep.subr.mxu0 0.0
    %1592 = vmatpush2.msra.mxu0 0.0
    %1593 = vmatprep.subr.mxu0 0.0
    %1594 = vmatpush2.msra.mxu0 0.0
    %1595 = vmatprep.subr.mxu0 0.0
    %1596 = vmatpush2.msra.mxu0 0.0
    %1597 = vmatprep.subr.mxu0 0.0
    %1598 = vmatpush2.msra.mxu0 0.0
    %1599 = vmatprep.subr.mxu0 0.0
    %1600 = vmatpush2.msra.mxu0 0.0
    %1601 = vmatprep.subr.mxu0 0.0
    %1602 = vmatpush2.msra.mxu0 0.0
    %1603 = vmatprep.subr.mxu0 0.0
    %1604 = vmatpush2.msra.mxu0 0.0
    %1605 = vmatprep.subr.mxu0 0.0
    %1606 = vmatpush2.msra.mxu0 0.0
    %1607 = vmatprep.mubr.f32.mxu0 0.0
    %1608 = vmatmul.mubr.f32.gmra.mxu0 %v1517
    %v1609 = vpop.f32.mrf.mxu0
    %v1610 = vadd.f32 %v1541, %v1609
    %v1611 = vpop.f32.mrf.mxu0
    %1612 = vdwg.mxu0
    %vm1613 = vcmp.ge.f32.partialorder %v1610, 0.0
    %v1614 = vmul.f32 %v1610, 0.01
    %v1615 = vsel %vm1613, %v1610, %v1614
    %s1616 = scalar_lea.vmem [#allocation5], 256
    %v1617 = vld [vmem:[%s1616] sm:$0xff]
    %v1618 = vld [vmem:[%s1616 + $0x8] sm:$0xff]
    %v1619 = vld [vmem:[%s1616 + $0x10] sm:$0xff]
    %v1620 = vld [vmem:[%s1616 + $0x18] sm:$0xff]
    %v1621 = vld [vmem:[%s1616 + $0x20] sm:$0xff]
    %v1622 = vld [vmem:[%s1616 + $0x28] sm:$0xff]
    %v1623 = vld [vmem:[%s1616 + $0x30] sm:$0xff]
    %v1624 = vld [vmem:[%s1616 + $0x38] sm:$0xff]
    %v1625 = vld [vmem:[%s1616 + $0x40] sm:$0xff]
    %v1626 = vld [vmem:[%s1616 + $0x48] sm:$0xff]
    %v1627 = vld [vmem:[%s1616 + $0x50] sm:$0xff]
    %v1628 = vld [vmem:[%s1616 + $0x58] sm:$0xff]
    %v1629 = vld [vmem:[%s1616 + $0x60] sm:$0xff]
    %v1630 = vld [vmem:[%s1616 + $0x68] sm:$0xff]
    %v1631 = vld [vmem:[%s1616 + $0x70] sm:$0xff]
    %v1632 = vld [vmem:[%s1616 + $0x78] sm:$0xff]
    %s1633 = scalar_lea.vmem %s9, 6
    %v1634 = vld [vmem:[%s1633] sm:$0x1]
    %v1636 = vlaneseq
    %v1637 = vshrl.u32 %v1636, 7
    %v1638 = vsub.s32 0, %v1637
    %v1639 = vrot.slane %v1634, %v1638
    %1641 = vmatprep.subr.mxu0 0.0
    %1642 = vmatpush1.msra.mxu0 %v1632
    %1643 = vmatprep.subr.mxu0 0.0
    %1644 = vmatpush1.msra.mxu0 %v1631
    %1645 = vmatprep.subr.mxu0 0.0
    %1646 = vmatpush1.msra.mxu0 %v1630
    %1647 = vmatprep.subr.mxu0 0.0
    %1648 = vmatpush1.msra.mxu0 %v1629
    %1649 = vmatprep.subr.mxu0 0.0
    %1650 = vmatpush1.msra.mxu0 %v1628
    %1651 = vmatprep.subr.mxu0 0.0
    %1652 = vmatpush1.msra.mxu0 %v1627
    %1653 = vmatprep.subr.mxu0 0.0
    %1654 = vmatpush1.msra.mxu0 %v1626
    %1655 = vmatprep.subr.mxu0 0.0
    %1656 = vmatpush1.msra.mxu0 %v1625
    %1657 = vmatprep.subr.mxu0 0.0
    %1658 = vmatpush1.msra.mxu0 %v1624
    %1659 = vmatprep.subr.mxu0 0.0
    %1660 = vmatpush1.msra.mxu0 %v1623
    %1661 = vmatprep.subr.mxu0 0.0
    %1662 = vmatpush1.msra.mxu0 %v1622
    %1663 = vmatprep.subr.mxu0 0.0
    %1664 = vmatpush1.msra.mxu0 %v1621
    %1665 = vmatprep.subr.mxu0 0.0
    %1666 = vmatpush1.msra.mxu0 %v1620
    %1667 = vmatprep.subr.mxu0 0.0
    %1668 = vmatpush1.msra.mxu0 %v1619
    %1669 = vmatprep.subr.mxu0 0.0
    %1670 = vmatpush1.msra.mxu0 %v1618
    %1671 = vmatprep.subr.mxu0 0.0
    %1672 = vmatpush1.msra.mxu0 %v1617
    %1673 = vmatprep.subr.mxu0 0.0
    %1674 = vmatpush2.msra.mxu0 0.0
    %1675 = vmatprep.subr.mxu0 0.0
    %1676 = vmatpush2.msra.mxu0 0.0
    %1677 = vmatprep.subr.mxu0 0.0
    %1678 = vmatpush2.msra.mxu0 0.0
    %1679 = vmatprep.subr.mxu0 0.0
    %1680 = vmatpush2.msra.mxu0 0.0
    %1681 = vmatprep.subr.mxu0 0.0
    %1682 = vmatpush2.msra.mxu0 0.0
    %1683 = vmatprep.subr.mxu0 0.0
    %1684 = vmatpush2.msra.mxu0 0.0
    %1685 = vmatprep.subr.mxu0 0.0
    %1686 = vmatpush2.msra.mxu0 0.0
    %1687 = vmatprep.subr.mxu0 0.0
    %1688 = vmatpush2.msra.mxu0 0.0
    %1689 = vmatprep.subr.mxu0 0.0
    %1690 = vmatpush2.msra.mxu0 0.0
    %1691 = vmatprep.subr.mxu0 0.0
    %1692 = vmatpush2.msra.mxu0 0.0
    %1693 = vmatprep.subr.mxu0 0.0
    %1694 = vmatpush2.msra.mxu0 0.0
    %1695 = vmatprep.subr.mxu0 0.0
    %1696 = vmatpush2.msra.mxu0 0.0
    %1697 = vmatprep.subr.mxu0 0.0
    %1698 = vmatpush2.msra.mxu0 0.0
    %1699 = vmatprep.subr.mxu0 0.0
    %1700 = vmatpush2.msra.mxu0 0.0
    %1701 = vmatprep.subr.mxu0 0.0
    %1702 = vmatpush2.msra.mxu0 0.0
    %1703 = vmatprep.subr.mxu0 0.0
    %1704 = vmatpush2.msra.mxu0 0.0
    %1705 = vmatprep.mubr.f32.mxu0 0.0
    %1706 = vmatmul.mubr.f32.gmra.mxu0 %v1615
    %v1707 = vpop.f32.mrf.mxu0
    %v1708 = vadd.f32 %v1639, %v1707
    %v1709 = vpop.f32.mrf.mxu0
    %1710 = vdwg.mxu0
    %vm1711 = vcmp.ge.f32.partialorder %v1708, 0.0
    %v1712 = vmul.f32 %v1708, 0.01
    %v1713 = vsel %vm1711, %v1708, %v1712
    %s1714 = scalar_lea.vmem [#allocation5], 384
    %v1715 = vld [vmem:[%s1714] sm:$0xff]
    %v1716 = vld [vmem:[%s1714 + $0x8] sm:$0xff]
    %v1717 = vld [vmem:[%s1714 + $0x10] sm:$0xff]
    %v1718 = vld [vmem:[%s1714 + $0x18] sm:$0xff]
    %v1719 = vld [vmem:[%s1714 + $0x20] sm:$0xff]
    %v1720 = vld [vmem:[%s1714 + $0x28] sm:$0xff]
    %v1721 = vld [vmem:[%s1714 + $0x30] sm:$0xff]
    %v1722 = vld [vmem:[%s1714 + $0x38] sm:$0xff]
    %v1723 = vld [vmem:[%s1714 + $0x40] sm:$0xff]
    %v1724 = vld [vmem:[%s1714 + $0x48] sm:$0xff]
    %v1725 = vld [vmem:[%s1714 + $0x50] sm:$0xff]
    %v1726 = vld [vmem:[%s1714 + $0x58] sm:$0xff]
    %v1727 = vld [vmem:[%s1714 + $0x60] sm:$0xff]
    %v1728 = vld [vmem:[%s1714 + $0x68] sm:$0xff]
    %v1729 = vld [vmem:[%s1714 + $0x70] sm:$0xff]
    %v1730 = vld [vmem:[%s1714 + $0x78] sm:$0xff]
    %s1731 = scalar_lea.vmem %s9, 7
    %v1732 = vld [vmem:[%s1731] sm:$0x1]
    %v1734 = vlaneseq
    %v1735 = vshrl.u32 %v1734, 7
    %v1736 = vsub.s32 0, %v1735
    %v1737 = vrot.slane %v1732, %v1736
    %1739 = vmatprep.subr.mxu0 0.0
    %1740 = vmatpush1.msra.mxu0 %v1730
    %1741 = vmatprep.subr.mxu0 0.0
    %1742 = vmatpush1.msra.mxu0 %v1729
    %1743 = vmatprep.subr.mxu0 0.0
    %1744 = vmatpush1.msra.mxu0 %v1728
    %1745 = vmatprep.subr.mxu0 0.0
    %1746 = vmatpush1.msra.mxu0 %v1727
    %1747 = vmatprep.subr.mxu0 0.0
    %1748 = vmatpush1.msra.mxu0 %v1726
    %1749 = vmatprep.subr.mxu0 0.0
    %1750 = vmatpush1.msra.mxu0 %v1725
    %1751 = vmatprep.subr.mxu0 0.0
    %1752 = vmatpush1.msra.mxu0 %v1724
    %1753 = vmatprep.subr.mxu0 0.0
    %1754 = vmatpush1.msra.mxu0 %v1723
    %1755 = vmatprep.subr.mxu0 0.0
    %1756 = vmatpush1.msra.mxu0 %v1722
    %1757 = vmatprep.subr.mxu0 0.0
    %1758 = vmatpush1.msra.mxu0 %v1721
    %1759 = vmatprep.subr.mxu0 0.0
    %1760 = vmatpush1.msra.mxu0 %v1720
    %1761 = vmatprep.subr.mxu0 0.0
    %1762 = vmatpush1.msra.mxu0 %v1719
    %1763 = vmatprep.subr.mxu0 0.0
    %1764 = vmatpush1.msra.mxu0 %v1718
    %1765 = vmatprep.subr.mxu0 0.0
    %1766 = vmatpush1.msra.mxu0 %v1717
    %1767 = vmatprep.subr.mxu0 0.0
    %1768 = vmatpush1.msra.mxu0 %v1716
    %1769 = vmatprep.subr.mxu0 0.0
    %1770 = vmatpush1.msra.mxu0 %v1715
    %1771 = vmatprep.subr.mxu0 0.0
    %1772 = vmatpush2.msra.mxu0 0.0
    %1773 = vmatprep.subr.mxu0 0.0
    %1774 = vmatpush2.msra.mxu0 0.0
    %1775 = vmatprep.subr.mxu0 0.0
    %1776 = vmatpush2.msra.mxu0 0.0
    %1777 = vmatprep.subr.mxu0 0.0
    %1778 = vmatpush2.msra.mxu0 0.0
    %1779 = vmatprep.subr.mxu0 0.0
    %1780 = vmatpush2.msra.mxu0 0.0
    %1781 = vmatprep.subr.mxu0 0.0
    %1782 = vmatpush2.msra.mxu0 0.0
    %1783 = vmatprep.subr.mxu0 0.0
    %1784 = vmatpush2.msra.mxu0 0.0
    %1785 = vmatprep.subr.mxu0 0.0
    %1786 = vmatpush2.msra.mxu0 0.0
    %1787 = vmatprep.subr.mxu0 0.0
    %1788 = vmatpush2.msra.mxu0 0.0
    %1789 = vmatprep.subr.mxu0 0.0
    %1790 = vmatpush2.msra.mxu0 0.0
    %1791 = vmatprep.subr.mxu0 0.0
    %1792 = vmatpush2.msra.mxu0 0.0
    %1793 = vmatprep.subr.mxu0 0.0
    %1794 = vmatpush2.msra.mxu0 0.0
    %1795 = vmatprep.subr.mxu0 0.0
    %1796 = vmatpush2.msra.mxu0 0.0
    %1797 = vmatprep.subr.mxu0 0.0
    %1798 = vmatpush2.msra.mxu0 0.0
    %1799 = vmatprep.subr.mxu0 0.0
    %1800 = vmatpush2.msra.mxu0 0.0
    %1801 = vmatprep.subr.mxu0 0.0
    %1802 = vmatpush2.msra.mxu0 0.0
    %1803 = vmatprep.mubr.f32.mxu0 0.0
    %1804 = vmatmul.mubr.f32.gmra.mxu0 %v1713
    %v1805 = vpop.f32.mrf.mxu0
    %v1806 = vadd.f32 %v1737, %v1805
    %v1807 = vpop.f32.mrf.mxu0
    %1808 = vdwg.mxu0
    %1809 = vst [vmem:[#allocation7] sm:$0xff] %v1806
    // Predicated region
    $region50: #{tpu_custom_call.1} parent=1 // pred_check
      _
    $region51: #{tpu_custom_call.1} parent=1 // pred_check_branch
      %1811 = sbr.rel (0) target = $region53
    $region52: #{tpu_custom_call.1} parent=1 // pred_region
      %s1813 = ssub.s32 128, 128
      %1814 = vsyncadd [#allocation4], %s1813
      %s1816 = sshll.u32 [#allocation7], 4
      %s1817 = int_to_ptr.vmem [resolvable:$true] %s1816
      %1819 = dma.vmem_to_hbm [thread:$0]  %s1817, 128, %s10, [#allocation4]
    $region53: #{tpu_custom_call.1} parent=1 // pred_fallthru
      _
    // Predicated region
    $region54: #{tpu_custom_call.1} parent=1 // pred_check
      _
    $region55: #{tpu_custom_call.1} parent=1 // pred_check_branch
      %1821 = sbr.rel (0) target = $region57
    $region56: #{tpu_custom_call.1} parent=1 // pred_region
      %1822 = dma.done [#allocation4], 128
    $region57: #{tpu_custom_call.1} parent=1 // pred_fallthru
      _
    %1823 = vsyncpa [#allocation3], 1
    %1824 = vsyncpa [#allocation6], 1
    %1825 = vsyncpa [#allocation4], 1

</llo_original>
